<compile_context>
chip_gen: v7x
topology: tpu7x:2x2x1
jax: 0.10.0
libtpu: 0.0.40
codegen_flags: <defaults>
</compile_context>

<pallas_src>
import functools

import jax
import jax.numpy as jnp
from jax.experimental import pallas as pl
from jax.experimental.pallas import tpu as pltpu


def _silu(x):
    return x * jax.nn.sigmoid(x)


def resblock_kernel(x_ref, d_ref, gm_ref, g0_ref, be0_ref, w0_ref, b0_ref,
                    g1_ref, be1_ref, w1_ref, b1_ref, out_ref, pbuf_ref,
                    *, H, WC, eps):
    # Zero only the 2-row top/bottom halo of the padded scratch; the interior
    # is fully overwritten below.  Per-step (4 rows, negligible) so the kernel
    # stays correct even if the parallel batch axis is split across cores.
    zrow = jnp.zeros((2, WC), pbuf_ref.dtype)
    pbuf_ref[pl.ds(0, 2), :] = zrow
    pbuf_ref[pl.ds(H + 2, 2), :] = zrow

    gm = gm_ref[...]                       # (WC, WC) group-mean matrix, f32
    x2 = x_ref[0]                          # (H, WC) f32, lane-dense

    def gn_silu(h, gamma, beta):
        # GroupNorm statistics in f32; the (1,WC)x(WC,WC) matmul both averages
        # within each channel group and broadcasts the result back into the
        # lane-dense (x*C + c) layout.
        s1 = jnp.sum(h, axis=0, keepdims=True)                 # (1, WC)
        s2 = jnp.sum(h * h, axis=0, keepdims=True)             # (1, WC)
        mean = jnp.dot(s1, gm, preferred_element_type=jnp.float32)
        meansq = jnp.dot(s2, gm, preferred_element_type=jnp.float32)
        var = jnp.maximum(meansq - mean * mean, 0.0)           # clamp cancellation
        y = (h - mean) * jax.lax.rsqrt(var + eps) * gamma + beta
        return y * jax.nn.sigmoid(y)                           # SiLU

    def conv5(w_ref, bias):
        # 5x5 "same" conv as 5 banded matmuls (one per ky); the kx taps and the
        # W-direction zero padding live inside the (WC, WC) weight matrices.
        acc = jnp.zeros((H, WC), jnp.float32)
        for ky in range(5):
            acc = acc + jnp.dot(pbuf_ref[pl.ds(ky, H), :], w_ref[ky],
                                preferred_element_type=jnp.float32)
        return acc + bias

    # ---- h = Conv_0(act(GroupNorm_0(x))) + Dense_0(act(emb)) ----
    a0 = gn_silu(x2, g0_ref[...], be0_ref[...])
    pbuf_ref[pl.ds(2, H), :] = a0.astype(pbuf_ref.dtype)       # bf16 MXU operand
    h = conv5(w0_ref, b0_ref[...]) + d_ref[0]

    # ---- h = Conv_1(act(GroupNorm_1(h))) ----
    a1 = gn_silu(h, g1_ref[...], be1_ref[...])
    pbuf_ref[pl.ds(2, H), :] = a1.astype(pbuf_ref.dtype)
    h2 = conv5(w1_ref, b1_ref[...])

    # ---- out = x + h ----
    out_ref[0] = x2 + h2


def _band_weight_mats(w_hwio, W, C, dtype=jnp.bfloat16):
    """Expand a (5, 5, Cin, Cout) HWIO kernel into 5 banded (W*C, W*C) mats.

    mats[ky][xp*C + ci, x*C + co] = w[ky, xp - x + 2, ci, co] when |xp - x| <= 2
    else 0, so (padded_rows[ky:ky+H] @ mats[ky]) applies all 5 kx taps of kernel
    row ky at once, with the W-direction zero padding implied by the band.
    """
    xs = jnp.arange(W)
    dx = xs[:, None] - xs[None, :] + 2                    # rows: xp, cols: x
    valid = (dx >= 0) & (dx <= 4)
    kx = jnp.clip(dx, 0, 4)
    m = w_hwio[:, kx]                                     # (5, W, W, C, C)
    m = jnp.where(valid[None, :, :, None, None], m, 0.0)
    m = jnp.transpose(m, (0, 1, 3, 2, 4)).reshape(5, W * C, W * C)
    return m.astype(dtype)


def resblock_pallas(x_nchw, scale_embedding, params, num_groups, eps=1e-6):
    x = jnp.transpose(x_nchw, (0, 2, 3, 1)).astype(jnp.float32)   # NHWC
    N, H, W, C = x.shape
    WC = W * C
    cg = C // num_groups
    x2 = x.reshape(N, H, WC)                                      # lane-dense slabs

    def tile_row(v):                                              # (..,C) -> (1, WC)
        return jnp.tile(jnp.reshape(v, (1, C)).astype(jnp.float32), (1, W))

    # Group-mean matrix in the lane-dense layout:
    # GM[x*C+ci, y*C+co] = 1/(cg*H*W) if group(ci) == group(co) else 0.
    ids = jnp.arange(C)
    same = ((ids[:, None] // cg) == (ids[None, :] // cg)).astype(jnp.float32)
    gm = jnp.tile(same, (W, W)) / float(cg * H * W)               # (WC, WC)

    wm0 = _band_weight_mats(params["w0"], W, C)                   # bf16
    wm1 = _band_weight_mats(params["w1"], W, C)                   # bf16

    # Embedding path precomputed in the wrapper: d = Dense_0(act(emb)), (N, C).
    if scale_embedding is not None:
        e = _silu(scale_embedding.astype(jnp.float32))
        d = e @ params["wd"] + jnp.reshape(params["bd"], (1, C))
    else:
        d = jnp.zeros((N, C), jnp.float32)
    d3 = jnp.tile(d, (1, W))[:, None, :]                          # (N, 1, WC)

    kernel = functools.partial(resblock_kernel, H=H, WC=WC, eps=eps)

    def const(shape):
        n = len(shape)
        return pl.BlockSpec(shape, lambda b, n=n: (0,) * n)

    # NOTE: for v5e/v6e (single TensorCore) a batch block >1 per grid step
    # would amortize per-step overhead further; kept at 1 image/step so dual-TC
    # chips still get >= 2 parallel steps at N=2.
    out = pl.pallas_call(
        kernel,
        out_shape=jax.ShapeDtypeStruct((N, H, WC), jnp.float32),
        grid=(N,),
        in_specs=[
            pl.BlockSpec((1, H, WC), lambda b: (b, 0, 0)),        # x slab
            pl.BlockSpec((1, 1, WC), lambda b: (b, 0, 0)),        # Dense(emb) row
            const((WC, WC)),                                      # group-mean mat
            const((1, WC)), const((1, WC)),                       # GN0 gamma/beta
            const((5, WC, WC)), const((1, WC)),                   # Conv0 W, bias
            const((1, WC)), const((1, WC)),                       # GN1 gamma/beta
            const((5, WC, WC)), const((1, WC)),                   # Conv1 W, bias
        ],
        out_specs=pl.BlockSpec((1, H, WC), lambda b: (b, 0, 0)),
        scratch_shapes=[pltpu.VMEM((H + 4, WC), jnp.bfloat16)],
        compiler_params=pltpu.CompilerParams(
            dimension_semantics=("parallel",),
            vmem_limit_bytes=32 * 1024 * 1024),
    )(x2, d3, gm,
      tile_row(params["g0"]), tile_row(params["be0"]), wm0, tile_row(params["b0"]),
      tile_row(params["g1"]), tile_row(params["be1"]), wm1, tile_row(params["b1"]))

    return jnp.transpose(out.reshape(N, H, W, C), (0, 3, 1, 2))   # back to NCHW


# ------------------------- pure-JAX reference -------------------------
def resblock_ref(x_nchw, emb, p, num_groups):
    eps = 1e-6
    x = jnp.transpose(x_nchw, (0, 2, 3, 1)).astype(jnp.float32)   # NHWC

    def gn(h, gamma, beta):
        n, H, W, C = h.shape
        hg = h.reshape(n, H, W, num_groups, C // num_groups)
        mean = hg.mean(axis=(1, 2, 4), keepdims=True)
        var = ((hg - mean) ** 2).mean(axis=(1, 2, 4), keepdims=True)
        hn = ((hg - mean) * jax.lax.rsqrt(var + eps)).reshape(n, H, W, C)
        return hn * gamma.reshape(1, 1, 1, C) + beta.reshape(1, 1, 1, C)

    def conv(h, w, b):
        y = jax.lax.conv_general_dilated(
            h, w, (1, 1), [(2, 2), (2, 2)],
            dimension_numbers=("NHWC", "HWIO", "NHWC"))
        return y + b.reshape(1, 1, 1, -1)

    h = conv(_silu(gn(x, p["g0"], p["be0"])), p["w0"], p["b0"])
    if emb is not None:
        d = _silu(emb.astype(jnp.float32)) @ p["wd"] + p["bd"]
        h = h + d[:, None, None, :]
    h = conv(_silu(gn(h, p["g1"], p["be1"])), p["w1"], p["b1"])
    out = x + h
    return jnp.transpose(out, (0, 3, 1, 2))


if __name__ == "__main__":
    key = jax.random.PRNGKey(0)
    N, C, H, W, E = 2, 8, 16, 16, 16          # hidden_dim=8, embed_dim=16
    num_groups = min(C // 4, 32)               # = 2

    ks = jax.random.split(key, 12)
    x = jax.random.normal(ks[0], (N, C, H, W), jnp.float32)
    scale_embedding = jax.random.normal(ks[1], (N, E), jnp.float32)

    def uniform(k, shape, bound):
        return jax.random.uniform(k, shape, jnp.float32, -bound, bound)

    b_conv = (C * 5 * 5) ** -0.5                           # torch Conv2d default bound
    b_dense = (3.0 / ((E + C) / 2.0)) ** 0.5               # default_init (fan_avg, uniform)

    params = dict(
        g0=1.0 + 0.1 * jax.random.normal(ks[2], (1, C), jnp.float32),
        be0=0.05 * jax.random.normal(ks[3], (1, C), jnp.float32),
        w0=uniform(ks[4], (5, 5, C, C), b_conv),           # HWIO
        b0=uniform(ks[5], (1, C), b_conv),
        g1=1.0 + 0.1 * jax.random.normal(ks[6], (1, C), jnp.float32),
        be1=0.05 * jax.random.normal(ks[7], (1, C), jnp.float32),
        w1=uniform(ks[8], (5, 5, C, C), b_conv),           # HWIO
        b1=uniform(ks[9], (1, C), b_conv),
        wd=uniform(ks[10], (E, C), b_dense),               # (embed_dim, hidden_dim)
        bd=jnp.zeros((1, C), jnp.float32),                 # nn.init.zeros_
    )

    run = jax.jit(lambda a, e: resblock_pallas(a, e, params, num_groups))
    out = jax.block_until_ready(run(x, scale_embedding))

    ref = jax.block_until_ready(resblock_ref(x, scale_embedding, params, num_groups))
    max_err = float(jnp.max(jnp.abs(out - ref)))
    assert out.shape == (N, C, H, W) and out.dtype == jnp.float32
    # Conv operands are bf16 on the MXU (accumulation in f32) -> relaxed tol.
    assert max_err < 5e-2, f"mismatch vs reference: {max_err}"

    print("KERNEL_OK")
</pallas_src>

<mosaic_0001>
module attributes {stable_mosaic.version = 11 : i64} {
  func.func @resblock_kernel(%arg0: i32, %arg1: memref<1x16x128xf32, #tpu.memory_space<vmem>>, %arg2: memref<1x1x128xf32, #tpu.memory_space<vmem>>, %arg3: memref<128x128xf32, #tpu.memory_space<vmem>>, %arg4: memref<1x128xf32, #tpu.memory_space<vmem>>, %arg5: memref<1x128xf32, #tpu.memory_space<vmem>>, %arg6: memref<5x128x128xbf16, #tpu.memory_space<vmem>>, %arg7: memref<1x128xf32, #tpu.memory_space<vmem>>, %arg8: memref<1x128xf32, #tpu.memory_space<vmem>>, %arg9: memref<1x128xf32, #tpu.memory_space<vmem>>, %arg10: memref<5x128x128xbf16, #tpu.memory_space<vmem>>, %arg11: memref<1x128xf32, #tpu.memory_space<vmem>>, %arg12: memref<1x16x128xf32, #tpu.memory_space<vmem>>, %arg13: memref<20x128xbf16, #tpu.memory_space<vmem>>) attributes {dimension_semantics = [#tpu.dimension_semantics<parallel>], iteration_bounds = array<i64: 2>, scalar_prefetch = 0 : i64, scratch_operands = 1 : i64, tpu.core_type = #tpu.core_type<tc>, window_params = [{transform_indices = @transform_0, window_bounds = array<i64: 1, 16, 128>}, {transform_indices = @transform_1, window_bounds = array<i64: 1, 1, 128>}, {pipeline_mode = #tpu.pipeline_mode<synchronous>, transform_indices = @transform_2, window_bounds = array<i64: 128, 128>}, {pipeline_mode = #tpu.pipeline_mode<synchronous>, transform_indices = @transform_3, window_bounds = array<i64: 1, 128>}, {pipeline_mode = #tpu.pipeline_mode<synchronous>, transform_indices = @transform_4, window_bounds = array<i64: 1, 128>}, {pipeline_mode = #tpu.pipeline_mode<synchronous>, transform_indices = @transform_5, window_bounds = array<i64: 5, 128, 128>}, {pipeline_mode = #tpu.pipeline_mode<synchronous>, transform_indices = @transform_6, window_bounds = array<i64: 1, 128>}, {pipeline_mode = #tpu.pipeline_mode<synchronous>, transform_indices = @transform_7, window_bounds = array<i64: 1, 128>}, {pipeline_mode = #tpu.pipeline_mode<synchronous>, transform_indices = @transform_8, window_bounds = array<i64: 1, 128>}, {pipeline_mode = #tpu.pipeline_mode<synchronous>, transform_indices = @transform_9, window_bounds = array<i64: 5, 128, 128>}, {pipeline_mode = #tpu.pipeline_mode<synchronous>, transform_indices = @transform_10, window_bounds = array<i64: 1, 128>}, {transform_indices = @transform_11, window_bounds = array<i64: 1, 16, 128>}]} {
    %cst = arith.constant 0.000000e+00 : bf16
    %0 = vector.broadcast %cst : bf16 to vector<2x128xbf16>
    %c0 = arith.constant 0 : index
    %c0_0 = arith.constant 0 : index
    %1 = vector.load %arg13[%c0, %c0_0] : memref<20x128xbf16, #tpu.memory_space<vmem>>, vector<2x128xbf16>
    tpu.vector_store %arg13[%c0, %c0_0], %0 {strides = array<i32>} : memref<20x128xbf16, #tpu.memory_space<vmem>>, vector<2x128xbf16>,
    %c18 = arith.constant 18 : index
    %c0_1 = arith.constant 0 : index
    %2 = vector.load %arg13[%c18, %c0_1] : memref<20x128xbf16, #tpu.memory_space<vmem>>, vector<2x128xbf16>
    tpu.vector_store %arg13[%c18, %c0_1], %0 {strides = array<i32>} : memref<20x128xbf16, #tpu.memory_space<vmem>>, vector<2x128xbf16>,
    %c0_2 = arith.constant 0 : index
    %c0_3 = arith.constant 0 : index
    %3 = vector.load %arg3[%c0_2, %c0_3] : memref<128x128xf32, #tpu.memory_space<vmem>>, vector<128x128xf32>
    %c0_4 = arith.constant 0 : index
    %c0_5 = arith.constant 0 : index
    %c0_6 = arith.constant 0 : index
    %4 = vector.load %arg1[%c0_4, %c0_5, %c0_6] : memref<1x16x128xf32, #tpu.memory_space<vmem>>, vector<1x16x128xf32>
    %5 = vector.shape_cast %4 : vector<1x16x128xf32> to vector<16x128xf32>
    %c0_7 = arith.constant 0 : index
    %c0_8 = arith.constant 0 : index
    %6 = vector.load %arg4[%c0_7, %c0_8] : memref<1x128xf32, #tpu.memory_space<vmem>>, vector<1x128xf32>
    %c0_9 = arith.constant 0 : index
    %c0_10 = arith.constant 0 : index
    %7 = vector.load %arg5[%c0_9, %c0_10] : memref<1x128xf32, #tpu.memory_space<vmem>>, vector<1x128xf32>
    %cst_11 = arith.constant dense<0.000000e+00> : vector<128xf32>
    %8 = vector.multi_reduction <add>, %5, %cst_11 [0] : vector<16x128xf32> to vector<128xf32>
    %9 = vector.shape_cast %8 : vector<128xf32> to vector<1x128xf32>
    %10 = arith.mulf %5, %5 : vector<16x128xf32>
    %cst_12 = arith.constant dense<0.000000e+00> : vector<128xf32>
    %11 = vector.multi_reduction <add>, %10, %cst_12 [0] : vector<16x128xf32> to vector<128xf32>
    %12 = vector.shape_cast %11 : vector<128xf32> to vector<1x128xf32>
    %cst_13 = arith.constant dense<0.000000e+00> : vector<1x128xf32>
    %13 = tpu.matmul %9, %3, %cst_13 {dimension_numbers = #tpu.dot_dimension_numbers<[1], [0], [0], [1], [0, 0, 1, 1], [], []>} : vector<1x128xf32>, vector<128x128xf32>, vector<1x128xf32> -> vector<1x128xf32>
    %cst_14 = arith.constant dense<0.000000e+00> : vector<1x128xf32>
    %14 = tpu.matmul %12, %3, %cst_14 {dimension_numbers = #tpu.dot_dimension_numbers<[1], [0], [0], [1], [0, 0, 1, 1], [], []>} : vector<1x128xf32>, vector<128x128xf32>, vector<1x128xf32> -> vector<1x128xf32>
    %15 = arith.mulf %13, %13 : vector<1x128xf32>
    %16 = arith.subf %14, %15 : vector<1x128xf32>
    %cst_15 = arith.constant 0.000000e+00 : f32
    %17 = vector.broadcast %cst_15 : f32 to vector<1x128xf32>
    %18 = arith.maximumf %16, %17 : vector<1x128xf32>
    %19 = vector.broadcast %13 : vector<1x128xf32> to vector<16x128xf32>
    %20 = arith.subf %5, %19 : vector<16x128xf32>
    %cst_16 = arith.constant 9.99999997E-7 : f32
    %21 = vector.broadcast %cst_16 : f32 to vector<1x128xf32>
    %22 = arith.addf %18, %21 : vector<1x128xf32>
    %23 = math.rsqrt %22 : vector<1x128xf32>
    %24 = vector.broadcast %23 : vector<1x128xf32> to vector<16x128xf32>
    %25 = arith.mulf %20, %24 : vector<16x128xf32>
    %26 = vector.broadcast %6 : vector<1x128xf32> to vector<16x128xf32>
    %27 = arith.mulf %25, %26 : vector<16x128xf32>
    %28 = vector.broadcast %7 : vector<1x128xf32> to vector<16x128xf32>
    %29 = arith.addf %27, %28 : vector<16x128xf32>
    %30 = arith.negf %29 : vector<16x128xf32>
    %31 = math.exp %30 : vector<16x128xf32>
    %cst_17 = arith.constant 1.000000e+00 : f32
    %32 = vector.broadcast %cst_17 : f32 to vector<16x128xf32>
    %33 = arith.addf %32, %31 : vector<16x128xf32>
    %34 = arith.divf %32, %33 : vector<16x128xf32>
    %35 = arith.mulf %29, %34 : vector<16x128xf32>
    %36 = arith.truncf %35 : vector<16x128xf32> to vector<16x128xbf16>
    %c2 = arith.constant 2 : index
    %c0_18 = arith.constant 0 : index
    %37 = vector.load %arg13[%c2, %c0_18] : memref<20x128xbf16, #tpu.memory_space<vmem>>, vector<16x128xbf16>
    tpu.vector_store %arg13[%c2, %c0_18], %36 {strides = array<i32>} : memref<20x128xbf16, #tpu.memory_space<vmem>>, vector<16x128xbf16>,
    %c0_19 = arith.constant 0 : index
    %c0_20 = arith.constant 0 : index
    %38 = vector.load %arg7[%c0_19, %c0_20] : memref<1x128xf32, #tpu.memory_space<vmem>>, vector<1x128xf32>
    %cst_21 = arith.constant 0.000000e+00 : f32
    %39 = vector.broadcast %cst_21 : f32 to vector<16x128xf32>
    %c0_22 = arith.constant 0 : index
    %c0_23 = arith.constant 0 : index
    %40 = vector.load %arg13[%c0_22, %c0_23] : memref<20x128xbf16, #tpu.memory_space<vmem>>, vector<16x128xbf16>
    %c0_24 = arith.constant 0 : index
    %c0_25 = arith.constant 0 : index
    %c0_26 = arith.constant 0 : index
    %41 = vector.load %arg6[%c0_24, %c0_25, %c0_26] : memref<5x128x128xbf16, #tpu.memory_space<vmem>>, vector<1x128x128xbf16>
    %42 = vector.shape_cast %41 : vector<1x128x128xbf16> to vector<128x128xbf16>
    %cst_27 = arith.constant dense<0.000000e+00> : vector<16x128xf32>
    %43 = tpu.matmul %40, %42, %cst_27 {dimension_numbers = #tpu.dot_dimension_numbers<[1], [0], [0], [1], [0, 0, 1, 1], [], []>} : vector<16x128xbf16>, vector<128x128xbf16>, vector<16x128xf32> -> vector<16x128xf32>
    %44 = arith.addf %39, %43 : vector<16x128xf32>
    %c1 = arith.constant 1 : index
    %c0_28 = arith.constant 0 : index
    %45 = vector.load %arg13[%c1, %c0_28] : memref<20x128xbf16, #tpu.memory_space<vmem>>, vector<16x128xbf16>
    %c1_29 = arith.constant 1 : index
    %c0_30 = arith.constant 0 : index
    %c0_31 = arith.constant 0 : index
    %46 = vector.load %arg6[%c1_29, %c0_30, %c0_31] : memref<5x128x128xbf16, #tpu.memory_space<vmem>>, vector<1x128x128xbf16>
    %47 = vector.shape_cast %46 : vector<1x128x128xbf16> to vector<128x128xbf16>
    %cst_32 = arith.constant dense<0.000000e+00> : vector<16x128xf32>
    %48 = tpu.matmul %45, %47, %cst_32 {dimension_numbers = #tpu.dot_dimension_numbers<[1], [0], [0], [1], [0, 0, 1, 1], [], []>} : vector<16x128xbf16>, vector<128x128xbf16>, vector<16x128xf32> -> vector<16x128xf32>
    %49 = arith.addf %44, %48 : vector<16x128xf32>
    %c2_33 = arith.constant 2 : index
    %c0_34 = arith.constant 0 : index
    %50 = vector.load %arg13[%c2_33, %c0_34] : memref<20x128xbf16, #tpu.memory_space<vmem>>, vector<16x128xbf16>
    %c2_35 = arith.constant 2 : index
    %c0_36 = arith.constant 0 : index
    %c0_37 = arith.constant 0 : index
    %51 = vector.load %arg6[%c2_35, %c0_36, %c0_37] : memref<5x128x128xbf16, #tpu.memory_space<vmem>>, vector<1x128x128xbf16>
    %52 = vector.shape_cast %51 : vector<1x128x128xbf16> to vector<128x128xbf16>
    %cst_38 = arith.constant dense<0.000000e+00> : vector<16x128xf32>
    %53 = tpu.matmul %50, %52, %cst_38 {dimension_numbers = #tpu.dot_dimension_numbers<[1], [0], [0], [1], [0, 0, 1, 1], [], []>} : vector<16x128xbf16>, vector<128x128xbf16>, vector<16x128xf32> -> vector<16x128xf32>
    %54 = arith.addf %49, %53 : vector<16x128xf32>
    %c3 = arith.constant 3 : index
    %c0_39 = arith.constant 0 : index
    %55 = vector.load %arg13[%c3, %c0_39] : memref<20x128xbf16, #tpu.memory_space<vmem>>, vector<16x128xbf16>
    %c3_40 = arith.constant 3 : index
    %c0_41 = arith.constant 0 : index
    %c0_42 = arith.constant 0 : index
    %56 = vector.load %arg6[%c3_40, %c0_41, %c0_42] : memref<5x128x128xbf16, #tpu.memory_space<vmem>>, vector<1x128x128xbf16>
    %57 = vector.shape_cast %56 : vector<1x128x128xbf16> to vector<128x128xbf16>
    %cst_43 = arith.constant dense<0.000000e+00> : vector<16x128xf32>
    %58 = tpu.matmul %55, %57, %cst_43 {dimension_numbers = #tpu.dot_dimension_numbers<[1], [0], [0], [1], [0, 0, 1, 1], [], []>} : vector<16x128xbf16>, vector<128x128xbf16>, vector<16x128xf32> -> vector<16x128xf32>
    %59 = arith.addf %54, %58 : vector<16x128xf32>
    %c4 = arith.constant 4 : index
    %c0_44 = arith.constant 0 : index
    %60 = vector.load %arg13[%c4, %c0_44] : memref<20x128xbf16, #tpu.memory_space<vmem>>, vector<16x128xbf16>
    %c4_45 = arith.constant 4 : index
    %c0_46 = arith.constant 0 : index
    %c0_47 = arith.constant 0 : index
    %61 = vector.load %arg6[%c4_45, %c0_46, %c0_47] : memref<5x128x128xbf16, #tpu.memory_space<vmem>>, vector<1x128x128xbf16>
    %62 = vector.shape_cast %61 : vector<1x128x128xbf16> to vector<128x128xbf16>
    %cst_48 = arith.constant dense<0.000000e+00> : vector<16x128xf32>
    %63 = tpu.matmul %60, %62, %cst_48 {dimension_numbers = #tpu.dot_dimension_numbers<[1], [0], [0], [1], [0, 0, 1, 1], [], []>} : vector<16x128xbf16>, vector<128x128xbf16>, vector<16x128xf32> -> vector<16x128xf32>
    %64 = arith.addf %59, %63 : vector<16x128xf32>
    %65 = vector.broadcast %38 : vector<1x128xf32> to vector<16x128xf32>
    %66 = arith.addf %64, %65 : vector<16x128xf32>
    %c0_49 = arith.constant 0 : index
    %c0_50 = arith.constant 0 : index
    %c0_51 = arith.constant 0 : index
    %67 = vector.load %arg2[%c0_49, %c0_50, %c0_51] : memref<1x1x128xf32, #tpu.memory_space<vmem>>, vector<1x1x128xf32>
    %68 = vector.shape_cast %67 : vector<1x1x128xf32> to vector<1x128xf32>
    %69 = vector.broadcast %68 : vector<1x128xf32> to vector<16x128xf32>
    %70 = arith.addf %66, %69 : vector<16x128xf32>
    %c0_52 = arith.constant 0 : index
    %c0_53 = arith.constant 0 : index
    %71 = vector.load %arg8[%c0_52, %c0_53] : memref<1x128xf32, #tpu.memory_space<vmem>>, vector<1x128xf32>
    %c0_54 = arith.constant 0 : index
    %c0_55 = arith.constant 0 : index
    %72 = vector.load %arg9[%c0_54, %c0_55] : memref<1x128xf32, #tpu.memory_space<vmem>>, vector<1x128xf32>
    %cst_56 = arith.constant dense<0.000000e+00> : vector<128xf32>
    %73 = vector.multi_reduction <add>, %70, %cst_56 [0] : vector<16x128xf32> to vector<128xf32>
    %74 = vector.shape_cast %73 : vector<128xf32> to vector<1x128xf32>
    %75 = arith.mulf %70, %70 : vector<16x128xf32>
    %cst_57 = arith.constant dense<0.000000e+00> : vector<128xf32>
    %76 = vector.multi_reduction <add>, %75, %cst_57 [0] : vector<16x128xf32> to vector<128xf32>
    %77 = vector.shape_cast %76 : vector<128xf32> to vector<1x128xf32>
    %cst_58 = arith.constant dense<0.000000e+00> : vector<1x128xf32>
    %78 = tpu.matmul %74, %3, %cst_58 {dimension_numbers = #tpu.dot_dimension_numbers<[1], [0], [0], [1], [0, 0, 1, 1], [], []>} : vector<1x128xf32>, vector<128x128xf32>, vector<1x128xf32> -> vector<1x128xf32>
    %cst_59 = arith.constant dense<0.000000e+00> : vector<1x128xf32>
    %79 = tpu.matmul %77, %3, %cst_59 {dimension_numbers = #tpu.dot_dimension_numbers<[1], [0], [0], [1], [0, 0, 1, 1], [], []>} : vector<1x128xf32>, vector<128x128xf32>, vector<1x128xf32> -> vector<1x128xf32>
    %80 = arith.mulf %78, %78 : vector<1x128xf32>
    %81 = arith.subf %79, %80 : vector<1x128xf32>
    %cst_60 = arith.constant 0.000000e+00 : f32
    %82 = vector.broadcast %cst_60 : f32 to vector<1x128xf32>
    %83 = arith.maximumf %81, %82 : vector<1x128xf32>
    %84 = vector.broadcast %78 : vector<1x128xf32> to vector<16x128xf32>
    %85 = arith.subf %70, %84 : vector<16x128xf32>
    %cst_61 = arith.constant 9.99999997E-7 : f32
    %86 = vector.broadcast %cst_61 : f32 to vector<1x128xf32>
    %87 = arith.addf %83, %86 : vector<1x128xf32>
    %88 = math.rsqrt %87 : vector<1x128xf32>
    %89 = vector.broadcast %88 : vector<1x128xf32> to vector<16x128xf32>
    %90 = arith.mulf %85, %89 : vector<16x128xf32>
    %91 = vector.broadcast %71 : vector<1x128xf32> to vector<16x128xf32>
    %92 = arith.mulf %90, %91 : vector<16x128xf32>
    %93 = vector.broadcast %72 : vector<1x128xf32> to vector<16x128xf32>
    %94 = arith.addf %92, %93 : vector<16x128xf32>
    %95 = arith.negf %94 : vector<16x128xf32>
    %96 = math.exp %95 : vector<16x128xf32>
    %cst_62 = arith.constant 1.000000e+00 : f32
    %97 = vector.broadcast %cst_62 : f32 to vector<16x128xf32>
    %98 = arith.addf %97, %96 : vector<16x128xf32>
    %99 = arith.divf %97, %98 : vector<16x128xf32>
    %100 = arith.mulf %94, %99 : vector<16x128xf32>
    %101 = arith.truncf %100 : vector<16x128xf32> to vector<16x128xbf16>
    %c2_63 = arith.constant 2 : index
    %c0_64 = arith.constant 0 : index
    %102 = vector.load %arg13[%c2_63, %c0_64] : memref<20x128xbf16, #tpu.memory_space<vmem>>, vector<16x128xbf16>
    tpu.vector_store %arg13[%c2_63, %c0_64], %101 {strides = array<i32>} : memref<20x128xbf16, #tpu.memory_space<vmem>>, vector<16x128xbf16>,
    %c0_65 = arith.constant 0 : index
    %c0_66 = arith.constant 0 : index
    %103 = vector.load %arg11[%c0_65, %c0_66] : memref<1x128xf32, #tpu.memory_space<vmem>>, vector<1x128xf32>
    %cst_67 = arith.constant 0.000000e+00 : f32
    %104 = vector.broadcast %cst_67 : f32 to vector<16x128xf32>
    %c0_68 = arith.constant 0 : index
    %c0_69 = arith.constant 0 : index
    %105 = vector.load %arg13[%c0_68, %c0_69] : memref<20x128xbf16, #tpu.memory_space<vmem>>, vector<16x128xbf16>
    %c0_70 = arith.constant 0 : index
    %c0_71 = arith.constant 0 : index
    %c0_72 = arith.constant 0 : index
    %106 = vector.load %arg10[%c0_70, %c0_71, %c0_72] : memref<5x128x128xbf16, #tpu.memory_space<vmem>>, vector<1x128x128xbf16>
    %107 = vector.shape_cast %106 : vector<1x128x128xbf16> to vector<128x128xbf16>
    %cst_73 = arith.constant dense<0.000000e+00> : vector<16x128xf32>
    %108 = tpu.matmul %105, %107, %cst_73 {dimension_numbers = #tpu.dot_dimension_numbers<[1], [0], [0], [1], [0, 0, 1, 1], [], []>} : vector<16x128xbf16>, vector<128x128xbf16>, vector<16x128xf32> -> vector<16x128xf32>
    %109 = arith.addf %104, %108 : vector<16x128xf32>
    %c1_74 = arith.constant 1 : index
    %c0_75 = arith.constant 0 : index
    %110 = vector.load %arg13[%c1_74, %c0_75] : memref<20x128xbf16, #tpu.memory_space<vmem>>, vector<16x128xbf16>
    %c1_76 = arith.constant 1 : index
    %c0_77 = arith.constant 0 : index
    %c0_78 = arith.constant 0 : index
    %111 = vector.load %arg10[%c1_76, %c0_77, %c0_78] : memref<5x128x128xbf16, #tpu.memory_space<vmem>>, vector<1x128x128xbf16>
    %112 = vector.shape_cast %111 : vector<1x128x128xbf16> to vector<128x128xbf16>
    %cst_79 = arith.constant dense<0.000000e+00> : vector<16x128xf32>
    %113 = tpu.matmul %110, %112, %cst_79 {dimension_numbers = #tpu.dot_dimension_numbers<[1], [0], [0], [1], [0, 0, 1, 1], [], []>} : vector<16x128xbf16>, vector<128x128xbf16>, vector<16x128xf32> -> vector<16x128xf32>
    %114 = arith.addf %109, %113 : vector<16x128xf32>
    %c2_80 = arith.constant 2 : index
    %c0_81 = arith.constant 0 : index
    %115 = vector.load %arg13[%c2_80, %c0_81] : memref<20x128xbf16, #tpu.memory_space<vmem>>, vector<16x128xbf16>
    %c2_82 = arith.constant 2 : index
    %c0_83 = arith.constant 0 : index
    %c0_84 = arith.constant 0 : index
    %116 = vector.load %arg10[%c2_82, %c0_83, %c0_84] : memref<5x128x128xbf16, #tpu.memory_space<vmem>>, vector<1x128x128xbf16>
    %117 = vector.shape_cast %116 : vector<1x128x128xbf16> to vector<128x128xbf16>
    %cst_85 = arith.constant dense<0.000000e+00> : vector<16x128xf32>
    %118 = tpu.matmul %115, %117, %cst_85 {dimension_numbers = #tpu.dot_dimension_numbers<[1], [0], [0], [1], [0, 0, 1, 1], [], []>} : vector<16x128xbf16>, vector<128x128xbf16>, vector<16x128xf32> -> vector<16x128xf32>
    %119 = arith.addf %114, %118 : vector<16x128xf32>
    %c3_86 = arith.constant 3 : index
    %c0_87 = arith.constant 0 : index
    %120 = vector.load %arg13[%c3_86, %c0_87] : memref<20x128xbf16, #tpu.memory_space<vmem>>, vector<16x128xbf16>
    %c3_88 = arith.constant 3 : index
    %c0_89 = arith.constant 0 : index
    %c0_90 = arith.constant 0 : index
    %121 = vector.load %arg10[%c3_88, %c0_89, %c0_90] : memref<5x128x128xbf16, #tpu.memory_space<vmem>>, vector<1x128x128xbf16>
    %122 = vector.shape_cast %121 : vector<1x128x128xbf16> to vector<128x128xbf16>
    %cst_91 = arith.constant dense<0.000000e+00> : vector<16x128xf32>
    %123 = tpu.matmul %120, %122, %cst_91 {dimension_numbers = #tpu.dot_dimension_numbers<[1], [0], [0], [1], [0, 0, 1, 1], [], []>} : vector<16x128xbf16>, vector<128x128xbf16>, vector<16x128xf32> -> vector<16x128xf32>
    %124 = arith.addf %119, %123 : vector<16x128xf32>
    %c4_92 = arith.constant 4 : index
    %c0_93 = arith.constant 0 : index
    %125 = vector.load %arg13[%c4_92, %c0_93] : memref<20x128xbf16, #tpu.memory_space<vmem>>, vector<16x128xbf16>
    %c4_94 = arith.constant 4 : index
    %c0_95 = arith.constant 0 : index
    %c0_96 = arith.constant 0 : index
    %126 = vector.load %arg10[%c4_94, %c0_95, %c0_96] : memref<5x128x128xbf16, #tpu.memory_space<vmem>>, vector<1x128x128xbf16>
    %127 = vector.shape_cast %126 : vector<1x128x128xbf16> to vector<128x128xbf16>
    %cst_97 = arith.constant dense<0.000000e+00> : vector<16x128xf32>
    %128 = tpu.matmul %125, %127, %cst_97 {dimension_numbers = #tpu.dot_dimension_numbers<[1], [0], [0], [1], [0, 0, 1, 1], [], []>} : vector<16x128xbf16>, vector<128x128xbf16>, vector<16x128xf32> -> vector<16x128xf32>
    %129 = arith.addf %124, %128 : vector<16x128xf32>
    %130 = vector.broadcast %103 : vector<1x128xf32> to vector<16x128xf32>
    %131 = arith.addf %129, %130 : vector<16x128xf32>
    %132 = arith.addf %5, %131 : vector<16x128xf32>
    %c0_98 = arith.constant 0 : index
    %c0_99 = arith.constant 0 : index
    %c0_100 = arith.constant 0 : index
    %133 = vector.load %arg12[%c0_98, %c0_99, %c0_100] : memref<1x16x128xf32, #tpu.memory_space<vmem>>, vector<1x16x128xf32>
    %134 = vector.shape_cast %133 : vector<1x16x128xf32> to vector<16x128xf32>
    %135 = vector.shape_cast %132 : vector<16x128xf32> to vector<1x16x128xf32>
    tpu.vector_store %arg12[%c0_98, %c0_99, %c0_100], %135 {strides = array<i32>} : memref<1x16x128xf32, #tpu.memory_space<vmem>>, vector<1x16x128xf32>,
    return
  }
  func.func @transform_0(%arg0: i32) -> (i32, i32, i32) {
    %c0_i32 = arith.constant 0 : i32
    %c0_i32_0 = arith.constant 0 : i32
    %c0_i32_1 = arith.constant 0 : i32
    return %arg0, %c0_i32, %c0_i32_0 : i32, i32, i32
  }
  func.func @transform_1(%arg0: i32) -> (i32, i32, i32) {
    %c0_i32 = arith.constant 0 : i32
    %c0_i32_0 = arith.constant 0 : i32
    %c0_i32_1 = arith.constant 0 : i32
    return %arg0, %c0_i32, %c0_i32_0 : i32, i32, i32
  }
  func.func @transform_2(%arg0: i32) -> (i32, i32) {
    %c0_i32 = arith.constant 0 : i32
    %c0_i32_0 = arith.constant 0 : i32
    %c0_i32_1 = arith.constant 0 : i32
    return %c0_i32, %c0_i32_0 : i32, i32
  }
  func.func @transform_3(%arg0: i32) -> (i32, i32) {
    %c0_i32 = arith.constant 0 : i32
    %c0_i32_0 = arith.constant 0 : i32
    %c0_i32_1 = arith.constant 0 : i32
    return %c0_i32, %c0_i32_0 : i32, i32
  }
  func.func @transform_4(%arg0: i32) -> (i32, i32) {
    %c0_i32 = arith.constant 0 : i32
    %c0_i32_0 = arith.constant 0 : i32
    %c0_i32_1 = arith.constant 0 : i32
    return %c0_i32, %c0_i32_0 : i32, i32
  }
  func.func @transform_5(%arg0: i32) -> (i32, i32, i32) {
    %c0_i32 = arith.constant 0 : i32
    %c0_i32_0 = arith.constant 0 : i32
    %c0_i32_1 = arith.constant 0 : i32
    %c0_i32_2 = arith.constant 0 : i32
    return %c0_i32, %c0_i32_0, %c0_i32_1 : i32, i32, i32
  }
  func.func @transform_6(%arg0: i32) -> (i32, i32) {
    %c0_i32 = arith.constant 0 : i32
    %c0_i32_0 = arith.constant 0 : i32
    %c0_i32_1 = arith.constant 0 : i32
    return %c0_i32, %c0_i32_0 : i32, i32
  }
  func.func @transform_7(%arg0: i32) -> (i32, i32) {
    %c0_i32 = arith.constant 0 : i32
    %c0_i32_0 = arith.constant 0 : i32
    %c0_i32_1 = arith.constant 0 : i32
    return %c0_i32, %c0_i32_0 : i32, i32
  }
  func.func @transform_8(%arg0: i32) -> (i32, i32) {
    %c0_i32 = arith.constant 0 : i32
    %c0_i32_0 = arith.constant 0 : i32
    %c0_i32_1 = arith.constant 0 : i32
    return %c0_i32, %c0_i32_0 : i32, i32
  }
  func.func @transform_9(%arg0: i32) -> (i32, i32, i32) {
    %c0_i32 = arith.constant 0 : i32
    %c0_i32_0 = arith.constant 0 : i32
    %c0_i32_1 = arith.constant 0 : i32
    %c0_i32_2 = arith.constant 0 : i32
    return %c0_i32, %c0_i32_0, %c0_i32_1 : i32, i32, i32
  }
  func.func @transform_10(%arg0: i32) -> (i32, i32) {
    %c0_i32 = arith.constant 0 : i32
    %c0_i32_0 = arith.constant 0 : i32
    %c0_i32_1 = arith.constant 0 : i32
    return %c0_i32, %c0_i32_0 : i32, i32
  }
  func.func @transform_11(%arg0: i32) -> (i32, i32, i32) {
    %c0_i32 = arith.constant 0 : i32
    %c0_i32_0 = arith.constant 0 : i32
    %c0_i32_1 = arith.constant 0 : i32
    return %arg0, %c0_i32, %c0_i32_0 : i32, i32, i32
  }
}

</mosaic_0001>

<llo_original>
// kernel: _lambda_.1
$region0: #{_lambda_.1}
  #allocation0 [shape = 'u32[]', space=smem, size = 0x4, offset = 0x4, fixed_abs, tag = 'smem constant byte address 0x4 - core index']
  #allocation1 [shape = 'u32[144,128]{1,0:T(1,128)}', space=vmem, size = 0x12000, scoped, tag = 'internal scratch']
  #allocation2 [shape = 'bf16[20,128]{1,0:T(8,128)(2,1)}', space=vmem, size = 0x1800, scoped, tag = 'scratch operand']
  %s0 = inlined_call_operand.vmem [shape: f32[2,16,128], index: 0, kind: input, shape index: {}]
  %s1 = inlined_call_operand.vmem [shape: f32[2,1,128], index: 1, kind: input, shape index: {}]
  %s2 = inlined_call_operand.vmem [shape: f32[128,128], index: 2, kind: input, shape index: {}]
  %s3 = inlined_call_operand.vmem [shape: f32[1,128], index: 3, kind: input, shape index: {}]
  %s4 = inlined_call_operand.vmem [shape: f32[1,128], index: 4, kind: input, shape index: {}]
  %s5 = inlined_call_operand.vmem [shape: bf16[5,128,128], index: 5, kind: input, shape index: {}]
  %s6 = inlined_call_operand.vmem [shape: f32[1,128], index: 6, kind: input, shape index: {}]
  %s7 = inlined_call_operand.vmem [shape: f32[1,128], index: 7, kind: input, shape index: {}]
  %s8 = inlined_call_operand.vmem [shape: f32[1,128], index: 8, kind: input, shape index: {}]
  %s9 = inlined_call_operand.vmem [shape: bf16[5,128,128], index: 9, kind: input, shape index: {}]
  %s10 = inlined_call_operand.vmem [shape: f32[1,128], index: 10, kind: input, shape index: {}]
  %s11 = inlined_call_operand.vmem [shape: f32[2,16,128], index: 11, kind: output, shape index: {}]
  %s12 = sld [smem:[#allocation0]]
  $region77: #{_lambda_.1} parent=0
    _
  %s14 = ssub.s32 1, %s12
  %s15 = scalar_select 0, %s14, %s12
  loop: start=0, step=1, limit=4
  $region2: #{_lambda_.1} parent=0 // loop_pre_header
    _
  $region3: #{_lambda_.1} parent=0 // loop_header
    %s17 = sphi 0, %s21
    %p18 = scmp.ge.s32.totalorder %s17, 4
    %s27 = sphi 0, %s29
    %s30 = sphi 0, %s27
    %s31 = sphi 0, %s30
    %s47 = sphi 0, %s31
    %s53 = sphi 0, %s55
    %s56 = sphi 0, %s53
    %s57 = sphi 0, %s56
    %s73 = sphi 0, %s57
    %s77 = sphi 0, %s77
    %s79 = sphi 0, %s77
    %s80 = sphi 0, %s79
    %s94 = sphi 0, %s80
    %s98 = sphi 0, %s98
    %s100 = sphi 0, %s98
    %s101 = sphi 0, %s100
    %s115 = sphi 0, %s101
    %s119 = sphi 0, %s119
    %s121 = sphi 0, %s119
    %s122 = sphi 0, %s121
    %s136 = sphi 0, %s122
    %s140 = sphi 0, %s140
    %s142 = sphi 0, %s140
    %s143 = sphi 0, %s142
    %s157 = sphi 0, %s143
    %s161 = sphi 0, %s161
    %s163 = sphi 0, %s161
    %s164 = sphi 0, %s163
    %s178 = sphi 0, %s164
    %s182 = sphi 0, %s182
    %s184 = sphi 0, %s182
    %s185 = sphi 0, %s184
    %s199 = sphi 0, %s185
    %s203 = sphi 0, %s203
    %s205 = sphi 0, %s203
    %s206 = sphi 0, %s205
    %s220 = sphi 0, %s206
    %s224 = sphi 0, %s224
    %s226 = sphi 0, %s224
    %s227 = sphi 0, %s226
    %s241 = sphi 0, %s227
    %s245 = sphi 0, %s245
    %s247 = sphi 0, %s245
    %s248 = sphi 0, %s247
    %s262 = sphi 0, %s248
    %s268 = sphi 0, %s270
    %s271 = sphi 0, %s268
    %s272 = sphi 0, %s271
    %s288 = sphi 0, %s272
  $region4: #{_lambda_.1} parent=0 // loop_header_branch
    %20 = sbr.rel (%p18) target = $region8
  $region5: #{_lambda_.1} parent=0 // loop_body
    %s22 = ssub.s32 %s17, 1
    %s23 = ssub.s32 %s17, 2
    %s24 = sadd.s32 %s17, 1
    %s25 = ssub.s32 %s17, %s24
    %p26 = scmp.eq.s32.totalorder %s25, 0
    %s28 = sadd.s32 %s27, 1
    %s29 = scalar_select %p26, %s27, %s28
    %p32 = pneg %p26
    %p33 = scmp.eq.s32.totalorder %s17, 1
    %p34 = por %p32, %p33
    %p35 = scmp.ne.s32.totalorder %s27, %s30
    %p36 = scmp.eq.s32.totalorder %s17, 0
    %p37 = por %p35, %p36
    %p38 = scmp.ne.s32.totalorder %s27, %s30
    %p39 = scmp.eq.s32.totalorder %s22, 1
    %p40 = por %p38, %p39
    %p41 = scmp.ne.s32.totalorder %s30, %s31
    %p42 = scmp.eq.s32.totalorder %s22, 0
    %p43 = por %p41, %p42
    %p44 = scmp.ne.s32.totalorder %s30, %s31
    %p45 = scmp.eq.s32.totalorder %s23, 1
    %p46 = por %p44, %p45
    %p48 = scmp.ne.s32.totalorder %s31, %s47
    %p49 = scmp.eq.s32.totalorder %s23, 0
    %p50 = por %p48, %p49
    %s51 = ssub.s32 %s17, %s24
    %p52 = scmp.eq.s32.totalorder %s51, 0
    %s54 = sadd.s32 %s53, 1
    %s55 = scalar_select %p52, %s53, %s54
    %p58 = pneg %p52
    %p59 = scmp.eq.s32.totalorder %s17, 1
    %p60 = por %p58, %p59
    %p61 = scmp.ne.s32.totalorder %s53, %s56
    %p62 = scmp.eq.s32.totalorder %s17, 0
    %p63 = por %p61, %p62
    %p64 = scmp.ne.s32.totalorder %s53, %s56
    %p65 = scmp.eq.s32.totalorder %s22, 1
    %p66 = por %p64, %p65
    %p67 = scmp.ne.s32.totalorder %s56, %s57
    %p68 = scmp.eq.s32.totalorder %s22, 0
    %p69 = por %p67, %p68
    %p70 = scmp.ne.s32.totalorder %s56, %s57
    %p71 = scmp.eq.s32.totalorder %s23, 1
    %p72 = por %p70, %p71
    %p74 = scmp.ne.s32.totalorder %s57, %s73
    %p75 = scmp.eq.s32.totalorder %s23, 0
    %p76 = por %p74, %p75
    %s78 = sadd.s32 %s77, 1
    %p81 = scmp.eq.s32.totalorder %s17, 1
    %p82 = scmp.ne.s32.totalorder %s77, %s79
    %p83 = scmp.eq.s32.totalorder %s17, 0
    %p84 = por %p82, %p83
    %p85 = scmp.ne.s32.totalorder %s77, %s79
    %p86 = scmp.eq.s32.totalorder %s22, 1
    %p87 = por %p85, %p86
    %p88 = scmp.ne.s32.totalorder %s79, %s80
    %p89 = scmp.eq.s32.totalorder %s22, 0
    %p90 = por %p88, %p89
    %p91 = scmp.ne.s32.totalorder %s79, %s80
    %p92 = scmp.eq.s32.totalorder %s23, 1
    %p93 = por %p91, %p92
    %p95 = scmp.ne.s32.totalorder %s80, %s94
    %p96 = scmp.eq.s32.totalorder %s23, 0
    %p97 = por %p95, %p96
    %s99 = sadd.s32 %s98, 1
    %p102 = scmp.eq.s32.totalorder %s17, 1
    %p103 = scmp.ne.s32.totalorder %s98, %s100
    %p104 = scmp.eq.s32.totalorder %s17, 0
    %p105 = por %p103, %p104
    %p106 = scmp.ne.s32.totalorder %s98, %s100
    %p107 = scmp.eq.s32.totalorder %s22, 1
    %p108 = por %p106, %p107
    %p109 = scmp.ne.s32.totalorder %s100, %s101
    %p110 = scmp.eq.s32.totalorder %s22, 0
    %p111 = por %p109, %p110
    %p112 = scmp.ne.s32.totalorder %s100, %s101
    %p113 = scmp.eq.s32.totalorder %s23, 1
    %p114 = por %p112, %p113
    %p116 = scmp.ne.s32.totalorder %s101, %s115
    %p117 = scmp.eq.s32.totalorder %s23, 0
    %p118 = por %p116, %p117
    %s120 = sadd.s32 %s119, 1
    %p123 = scmp.eq.s32.totalorder %s17, 1
    %p124 = scmp.ne.s32.totalorder %s119, %s121
    %p125 = scmp.eq.s32.totalorder %s17, 0
    %p126 = por %p124, %p125
    %p127 = scmp.ne.s32.totalorder %s119, %s121
    %p128 = scmp.eq.s32.totalorder %s22, 1
    %p129 = por %p127, %p128
    %p130 = scmp.ne.s32.totalorder %s121, %s122
    %p131 = scmp.eq.s32.totalorder %s22, 0
    %p132 = por %p130, %p131
    %p133 = scmp.ne.s32.totalorder %s121, %s122
    %p134 = scmp.eq.s32.totalorder %s23, 1
    %p135 = por %p133, %p134
    %p137 = scmp.ne.s32.totalorder %s122, %s136
    %p138 = scmp.eq.s32.totalorder %s23, 0
    %p139 = por %p137, %p138
    %s141 = sadd.s32 %s140, 1
    %p144 = scmp.eq.s32.totalorder %s17, 1
    %p145 = scmp.ne.s32.totalorder %s140, %s142
    %p146 = scmp.eq.s32.totalorder %s17, 0
    %p147 = por %p145, %p146
    %p148 = scmp.ne.s32.totalorder %s140, %s142
    %p149 = scmp.eq.s32.totalorder %s22, 1
    %p150 = por %p148, %p149
    %p151 = scmp.ne.s32.totalorder %s142, %s143
    %p152 = scmp.eq.s32.totalorder %s22, 0
    %p153 = por %p151, %p152
    %p154 = scmp.ne.s32.totalorder %s142, %s143
    %p155 = scmp.eq.s32.totalorder %s23, 1
    %p156 = por %p154, %p155
    %p158 = scmp.ne.s32.totalorder %s143, %s157
    %p159 = scmp.eq.s32.totalorder %s23, 0
    %p160 = por %p158, %p159
    %s162 = sadd.s32 %s161, 1
    %p165 = scmp.eq.s32.totalorder %s17, 1
    %p166 = scmp.ne.s32.totalorder %s161, %s163
    %p167 = scmp.eq.s32.totalorder %s17, 0
    %p168 = por %p166, %p167
    %p169 = scmp.ne.s32.totalorder %s161, %s163
    %p170 = scmp.eq.s32.totalorder %s22, 1
    %p171 = por %p169, %p170
    %p172 = scmp.ne.s32.totalorder %s163, %s164
    %p173 = scmp.eq.s32.totalorder %s22, 0
    %p174 = por %p172, %p173
    %p175 = scmp.ne.s32.totalorder %s163, %s164
    %p176 = scmp.eq.s32.totalorder %s23, 1
    %p177 = por %p175, %p176
    %p179 = scmp.ne.s32.totalorder %s164, %s178
    %p180 = scmp.eq.s32.totalorder %s23, 0
    %p181 = por %p179, %p180
    %s183 = sadd.s32 %s182, 1
    %p186 = scmp.eq.s32.totalorder %s17, 1
    %p187 = scmp.ne.s32.totalorder %s182, %s184
    %p188 = scmp.eq.s32.totalorder %s17, 0
    %p189 = por %p187, %p188
    %p190 = scmp.ne.s32.totalorder %s182, %s184
    %p191 = scmp.eq.s32.totalorder %s22, 1
    %p192 = por %p190, %p191
    %p193 = scmp.ne.s32.totalorder %s184, %s185
    %p194 = scmp.eq.s32.totalorder %s22, 0
    %p195 = por %p193, %p194
    %p196 = scmp.ne.s32.totalorder %s184, %s185
    %p197 = scmp.eq.s32.totalorder %s23, 1
    %p198 = por %p196, %p197
    %p200 = scmp.ne.s32.totalorder %s185, %s199
    %p201 = scmp.eq.s32.totalorder %s23, 0
    %p202 = por %p200, %p201
    %s204 = sadd.s32 %s203, 1
    %p207 = scmp.eq.s32.totalorder %s17, 1
    %p208 = scmp.ne.s32.totalorder %s203, %s205
    %p209 = scmp.eq.s32.totalorder %s17, 0
    %p210 = por %p208, %p209
    %p211 = scmp.ne.s32.totalorder %s203, %s205
    %p212 = scmp.eq.s32.totalorder %s22, 1
    %p213 = por %p211, %p212
    %p214 = scmp.ne.s32.totalorder %s205, %s206
    %p215 = scmp.eq.s32.totalorder %s22, 0
    %p216 = por %p214, %p215
    %p217 = scmp.ne.s32.totalorder %s205, %s206
    %p218 = scmp.eq.s32.totalorder %s23, 1
    %p219 = por %p217, %p218
    %p221 = scmp.ne.s32.totalorder %s206, %s220
    %p222 = scmp.eq.s32.totalorder %s23, 0
    %p223 = por %p221, %p222
    %s225 = sadd.s32 %s224, 1
    %p228 = scmp.eq.s32.totalorder %s17, 1
    %p229 = scmp.ne.s32.totalorder %s224, %s226
    %p230 = scmp.eq.s32.totalorder %s17, 0
    %p231 = por %p229, %p230
    %p232 = scmp.ne.s32.totalorder %s224, %s226
    %p233 = scmp.eq.s32.totalorder %s22, 1
    %p234 = por %p232, %p233
    %p235 = scmp.ne.s32.totalorder %s226, %s227
    %p236 = scmp.eq.s32.totalorder %s22, 0
    %p237 = por %p235, %p236
    %p238 = scmp.ne.s32.totalorder %s226, %s227
    %p239 = scmp.eq.s32.totalorder %s23, 1
    %p240 = por %p238, %p239
    %p242 = scmp.ne.s32.totalorder %s227, %s241
    %p243 = scmp.eq.s32.totalorder %s23, 0
    %p244 = por %p242, %p243
    %s246 = sadd.s32 %s245, 1
    %p249 = scmp.eq.s32.totalorder %s17, 1
    %p250 = scmp.ne.s32.totalorder %s245, %s247
    %p251 = scmp.eq.s32.totalorder %s17, 0
    %p252 = por %p250, %p251
    %p253 = scmp.ne.s32.totalorder %s245, %s247
    %p254 = scmp.eq.s32.totalorder %s22, 1
    %p255 = por %p253, %p254
    %p256 = scmp.ne.s32.totalorder %s247, %s248
    %p257 = scmp.eq.s32.totalorder %s22, 0
    %p258 = por %p256, %p257
    %p259 = scmp.ne.s32.totalorder %s247, %s248
    %p260 = scmp.eq.s32.totalorder %s23, 1
    %p261 = por %p259, %p260
    %p263 = scmp.ne.s32.totalorder %s248, %s262
    %p264 = scmp.eq.s32.totalorder %s23, 0
    %p265 = por %p263, %p264
    %s266 = ssub.s32 %s17, %s24
    %p267 = scmp.eq.s32.totalorder %s266, 0
    %s269 = sadd.s32 %s268, 1
    %s270 = scalar_select %p267, %s268, %s269
    %p273 = pneg %p267
    %p274 = scmp.eq.s32.totalorder %s17, 1
    %p275 = por %p273, %p274
    %p276 = scmp.ne.s32.totalorder %s268, %s271
    %p277 = scmp.eq.s32.totalorder %s17, 0
    %p278 = por %p276, %p277
    %p279 = scmp.ne.s32.totalorder %s268, %s271
    %p280 = scmp.eq.s32.totalorder %s22, 1
    %p281 = por %p279, %p280
    %p282 = scmp.ne.s32.totalorder %s271, %s272
    %p283 = scmp.eq.s32.totalorder %s22, 0
    %p284 = por %p282, %p283
    %p285 = scmp.ne.s32.totalorder %s271, %s272
    %p286 = scmp.eq.s32.totalorder %s23, 1
    %p287 = por %p285, %p286
    %p289 = scmp.ne.s32.totalorder %s272, %s288
    %p290 = scmp.eq.s32.totalorder %s23, 0
    %p291 = por %p289, %p290
    %p292 = scmp.le.s32.totalorder 1, %s17
    %p293 = scmp.lt.s32.totalorder %s17, 3
    %p294 = pnand %p292, %p293
    %p295 = pneg %p294
    // Predicated region
    $region9: #{_lambda_.1} parent=5 // pred_check
      _
    $region10: #{_lambda_.1} parent=5 // pred_check_branch
      %297 = sbr.rel (%p294) target = $region12
    $region11: #{_lambda_.1} parent=5 // pred_region
      %s298 = ssub.s32 %s17, 1
      // Predicated region
      $region13: #{_lambda_.1} parent=11 // pred_check
        %p299 = pneg %p90
      $region14: #{_lambda_.1} parent=11 // pred_check_branch
        %301 = sbr.rel (%p299) target = $region16
      $region15: #{_lambda_.1} parent=11 // pred_region
        _
      $region16: #{_lambda_.1} parent=11 // pred_fallthru
        _
      // Predicated region
      $region17: #{_lambda_.1} parent=11 // pred_check
        %p302 = pneg %p111
      $region18: #{_lambda_.1} parent=11 // pred_check_branch
        %304 = sbr.rel (%p302) target = $region20
      $region19: #{_lambda_.1} parent=11 // pred_region
        _
      $region20: #{_lambda_.1} parent=11 // pred_fallthru
        _
      // Predicated region
      $region21: #{_lambda_.1} parent=11 // pred_check
        %p305 = pneg %p132
      $region22: #{_lambda_.1} parent=11 // pred_check_branch
        %307 = sbr.rel (%p305) target = $region24
      $region23: #{_lambda_.1} parent=11 // pred_region
        _
      $region24: #{_lambda_.1} parent=11 // pred_fallthru
        _
      // Predicated region
      $region25: #{_lambda_.1} parent=11 // pred_check
        %p308 = pneg %p153
      $region26: #{_lambda_.1} parent=11 // pred_check_branch
        %310 = sbr.rel (%p308) target = $region28
      $region27: #{_lambda_.1} parent=11 // pred_region
        _
      $region28: #{_lambda_.1} parent=11 // pred_fallthru
        _
      // Predicated region
      $region29: #{_lambda_.1} parent=11 // pred_check
        %p311 = pneg %p174
      $region30: #{_lambda_.1} parent=11 // pred_check_branch
        %313 = sbr.rel (%p311) target = $region32
      $region31: #{_lambda_.1} parent=11 // pred_region
        _
      $region32: #{_lambda_.1} parent=11 // pred_fallthru
        _
      // Predicated region
      $region33: #{_lambda_.1} parent=11 // pred_check
        %p314 = pneg %p195
      $region34: #{_lambda_.1} parent=11 // pred_check_branch
        %316 = sbr.rel (%p314) target = $region36
      $region35: #{_lambda_.1} parent=11 // pred_region
        _
      $region36: #{_lambda_.1} parent=11 // pred_fallthru
        _
      // Predicated region
      $region37: #{_lambda_.1} parent=11 // pred_check
        %p317 = pneg %p216
      $region38: #{_lambda_.1} parent=11 // pred_check_branch
        %319 = sbr.rel (%p317) target = $region40
      $region39: #{_lambda_.1} parent=11 // pred_region
        _
      $region40: #{_lambda_.1} parent=11 // pred_fallthru
        _
      // Predicated region
      $region41: #{_lambda_.1} parent=11 // pred_check
        %p320 = pneg %p237
      $region42: #{_lambda_.1} parent=11 // pred_check_branch
        %322 = sbr.rel (%p320) target = $region44
      $region43: #{_lambda_.1} parent=11 // pred_region
        _
      $region44: #{_lambda_.1} parent=11 // pred_fallthru
        _
      // Predicated region
      $region45: #{_lambda_.1} parent=11 // pred_check
        %p323 = pneg %p258
      $region46: #{_lambda_.1} parent=11 // pred_check_branch
        %325 = sbr.rel (%p323) target = $region48
      $region47: #{_lambda_.1} parent=11 // pred_region
        _
      $region48: #{_lambda_.1} parent=11 // pred_fallthru
        _
    $region12: #{_lambda_.1} parent=5 // pred_fallthru
      _
    %p326 = scmp.lt.s32.totalorder %s17, 2
    // Predicated region
    $region49: #{_lambda_.1} parent=5 // pred_check
      %p327 = pneg %p326
    $region50: #{_lambda_.1} parent=5 // pred_check_branch
      %329 = sbr.rel (%p327) target = $region52
    $region51: #{_lambda_.1} parent=5 // pred_region
      // Predicated region
      $region53: #{_lambda_.1} parent=51 // pred_check
        %p330 = pneg %p37
      $region54: #{_lambda_.1} parent=51 // pred_check_branch
        %332 = sbr.rel (%p330) target = $region56
      $region55: #{_lambda_.1} parent=51 // pred_region
        %p333 = scmp.lt.s32.totalorder %s17, 1
        %s334 = scalar_select %p333, %s17, 1
        %s335 = smul.addr %s334, 2
        %s336 = smul.addr %s335, 8
        %s337 = scalar_lea.vmem %s0, %s336
      $region56: #{_lambda_.1} parent=51 // pred_fallthru
        _
      // Predicated region
      $region57: #{_lambda_.1} parent=51 // pred_check
        %p338 = pneg %p63
      $region58: #{_lambda_.1} parent=51 // pred_check_branch
        %340 = sbr.rel (%p338) target = $region60
      $region59: #{_lambda_.1} parent=51 // pred_region
        %p341 = scmp.lt.s32.totalorder %s17, 1
        %s342 = scalar_select %p341, %s17, 1
        %s343 = scalar_lea.vmem %s1, %s342
      $region60: #{_lambda_.1} parent=51 // pred_fallthru
        _
    $region52: #{_lambda_.1} parent=5 // pred_fallthru
      _
    %p344 = scmp.le.s32.totalorder 1, %s17
    %p345 = scmp.lt.s32.totalorder %s17, 3
    %p346 = pnand %p344, %p345
    %p347 = pneg %p346
    // Predicated region
    $region61: #{_lambda_.1} parent=5 // pred_check
      _
    $region62: #{_lambda_.1} parent=5 // pred_check_branch
      %349 = sbr.rel (%p346) target = $region64
    $region63: #{_lambda_.1} parent=5 // pred_region
      %s350 = ssub.s32 %s17, 1
      %p351 = scmp.lt.s32.totalorder %s22, 1
      %s352 = scalar_select %p351, %s22, 1
      %s353 = smul.addr %s352, 2
      %s354 = smul.addr %s353, 8
      %s355 = scalar_lea.vmem %s0, %s354
      %p356 = pneg %p43
      %p357 = pneg %p40
      %p358 = scmp.lt.s32.totalorder %s22, 1
      %s359 = scalar_select %p358, %s22, 1
      %s360 = scalar_lea.vmem %s1, %s359
      %p361 = pneg %p69
      %p362 = pneg %p66
      %p363 = pneg %p90
      %p364 = pneg %p87
      %p365 = pneg %p111
      %p366 = pneg %p108
      %p367 = pneg %p132
      %p368 = pneg %p129
      %p369 = pneg %p153
      %p370 = pneg %p150
      %p371 = pneg %p174
      %p372 = pneg %p171
      %p373 = pneg %p195
      %p374 = pneg %p192
      %p375 = pneg %p216
      %p376 = pneg %p213
      %p377 = pneg %p237
      %p378 = pneg %p234
      %p379 = pneg %p258
      %p380 = pneg %p255
      %p381 = pneg %p284
      %p382 = pneg %p281
      %p383 = scmp.lt.s32.totalorder %s22, 1
      %s384 = scalar_select %p383, %s22, 1
      %s385 = smul.addr %s384, 2
      %s386 = smul.addr %s385, 8
      %s387 = scalar_lea.vmem %s11, %s386
      %p388 = scmp.lt.s32.totalorder %s22, 1
      %s389 = scalar_select %p388, %s22, 1
      %s390 = smul.addr %s389, 2
      %s391 = smul.addr %s390, 8
      %s392 = scalar_lea.vmem %s0, %s391
      %p393 = scmp.lt.s32.totalorder %s22, 1
      %s394 = scalar_select %p393, %s22, 1
      %s395 = scalar_lea.vmem %s1, %s394
      %p396 = scmp.lt.s32.totalorder %s22, 1
      %s397 = scalar_select %p396, %s22, 1
      %s398 = smul.addr %s397, 2
      %s399 = smul.addr %s398, 8
      %s400 = scalar_lea.vmem %s11, %s399
      %402 = vst [vmem:[#allocation2] sm:$0x1] 0
      %403 = vst [vmem:[#allocation2 + $0x8] sm:$0x2] 0
      %v404 = vld [vmem:[%s2] sm:$0xff]
      %v405 = vld [vmem:[%s2 + $0x8] sm:$0xff]
      %v406 = vld [vmem:[%s2 + $0x10] sm:$0xff]
      %v407 = vld [vmem:[%s2 + $0x18] sm:$0xff]
      %v408 = vld [vmem:[%s2 + $0x20] sm:$0xff]
      %v409 = vld [vmem:[%s2 + $0x28] sm:$0xff]
      %v410 = vld [vmem:[%s2 + $0x30] sm:$0xff]
      %v411 = vld [vmem:[%s2 + $0x38] sm:$0xff]
      %v412 = vld [vmem:[%s2 + $0x40] sm:$0xff]
      %v413 = vld [vmem:[%s2 + $0x48] sm:$0xff]
      %v414 = vld [vmem:[%s2 + $0x50] sm:$0xff]
      %v415 = vld [vmem:[%s2 + $0x58] sm:$0xff]
      %v416 = vld [vmem:[%s2 + $0x60] sm:$0xff]
      %v417 = vld [vmem:[%s2 + $0x68] sm:$0xff]
      %v418 = vld [vmem:[%s2 + $0x70] sm:$0xff]
      %v419 = vld [vmem:[%s2 + $0x78] sm:$0xff]
      %v420 = vld [vmem:[%s392] sm:$0xff]
      %v421 = vld [vmem:[%s392 + $0x8] sm:$0xff]
      %v422 = vld [vmem:[%s3] sm:$0x1]
      %v423 = vld [vmem:[%s4] sm:$0x1]
      %v424 = vadd.f32 %v420, %v421
      %v425 = vrot.slane %v424, 4
      %v426 = vadd.f32 %v424, %v425
      %v427 = vrot.slane %v426, 2
      %v428 = vadd.f32 %v426, %v427
      %v429 = vrot.slane %v428, 1
      %v430 = vadd.f32 %v428, %v429
      %v431 = vmul.f32 %v420, %v420
      %v432 = vmul.f32 %v421, %v421
      %v433 = vadd.f32 %v431, %v432
      %v434 = vrot.slane %v433, 4
      %v435 = vadd.f32 %v433, %v434
      %v436 = vrot.slane %v435, 2
      %v437 = vadd.f32 %v435, %v436
      %v438 = vrot.slane %v437, 1
      %v439 = vadd.f32 %v437, %v438
      %440 = vmatprep.subr.mxu0 0.0
      %441 = vmatpush1.msra.mxu0 %v404
      %442 = vmatprep.subr.mxu0 0.0
      %443 = vmatpush1.msra.mxu0 %v405
      %444 = vmatprep.subr.mxu0 0.0
      %445 = vmatpush1.msra.mxu0 %v406
      %446 = vmatprep.subr.mxu0 0.0
      %447 = vmatpush1.msra.mxu0 %v407
      %448 = vmatprep.subr.mxu0 0.0
      %449 = vmatpush1.msra.mxu0 %v408
      %450 = vmatprep.subr.mxu0 0.0
      %451 = vmatpush1.msra.mxu0 %v409
      %452 = vmatprep.subr.mxu0 0.0
      %453 = vmatpush1.msra.mxu0 %v410
      %454 = vmatprep.subr.mxu0 0.0
      %455 = vmatpush1.msra.mxu0 %v411
      %456 = vmatprep.subr.mxu0 0.0
      %457 = vmatpush1.msra.mxu0 %v412
      %458 = vmatprep.subr.mxu0 0.0
      %459 = vmatpush1.msra.mxu0 %v413
      %460 = vmatprep.subr.mxu0 0.0
      %461 = vmatpush1.msra.mxu0 %v414
      %462 = vmatprep.subr.mxu0 0.0
      %463 = vmatpush1.msra.mxu0 %v415
      %464 = vmatprep.subr.mxu0 0.0
      %465 = vmatpush1.msra.mxu0 %v416
      %466 = vmatprep.subr.mxu0 0.0
      %467 = vmatpush1.msra.mxu0 %v417
      %468 = vmatprep.subr.mxu0 0.0
      %469 = vmatpush1.msra.mxu0 %v418
      %470 = vmatprep.subr.mxu0 0.0
      %471 = vmatpush1.msra.mxu0 %v419
      %472 = vmatprep.subr.mxu0 0.0
      %473 = vmatpush1.msra.mxu0 0.0
      %474 = vmatprep.subr.mxu0 0.0
      %475 = vmatpush1.msra.mxu0 0.0
      %476 = vmatprep.subr.mxu0 0.0
      %477 = vmatpush1.msra.mxu0 0.0
      %478 = vmatprep.subr.mxu0 0.0
      %479 = vmatpush1.msra.mxu0 0.0
      %480 = vmatprep.subr.mxu0 0.0
      %481 = vmatpush1.msra.mxu0 0.0
      %482 = vmatprep.subr.mxu0 0.0
      %483 = vmatpush1.msra.mxu0 0.0
      %484 = vmatprep.subr.mxu0 0.0
      %485 = vmatpush1.msra.mxu0 0.0
      %486 = vmatprep.subr.mxu0 0.0
      %487 = vmatpush1.msra.mxu0 0.0
      %488 = vmatprep.subr.mxu0 0.0
      %489 = vmatpush1.msra.mxu0 0.0
      %490 = vmatprep.subr.mxu0 0.0
      %491 = vmatpush1.msra.mxu0 0.0
      %492 = vmatprep.subr.mxu0 0.0
      %493 = vmatpush1.msra.mxu0 0.0
      %494 = vmatprep.subr.mxu0 0.0
      %495 = vmatpush1.msra.mxu0 0.0
      %496 = vmatprep.subr.mxu0 0.0
      %497 = vmatpush1.msra.mxu0 0.0
      %498 = vmatprep.subr.mxu0 0.0
      %499 = vmatpush1.msra.mxu0 0.0
      %500 = vmatprep.subr.mxu0 0.0
      %501 = vmatpush1.msra.mxu0 0.0
      %502 = vmatprep.subr.mxu0 0.0
      %503 = vmatpush1.msra.mxu0 0.0
      %504 = vmatprep.mubr.f32.mxu0 0.0
      %505 = vmatmul.mubr.f32.gmra.mrb[0].mxu0 %v430
      %v506 = vpop.f32.mrb[0].mxu0
      %v507 = vadd.f32 0.0, %v506
      %v508 = vpop.f32.mrb[0].mxu0
      %509 = vdwg.mxu0
      %510 = vmatprep.subr.mxu0 0.0
      %511 = vmatpush1.msra.mxu0 %v404
      %512 = vmatprep.subr.mxu0 0.0
      %513 = vmatpush1.msra.mxu0 %v405
      %514 = vmatprep.subr.mxu0 0.0
      %515 = vmatpush1.msra.mxu0 %v406
      %516 = vmatprep.subr.mxu0 0.0
      %517 = vmatpush1.msra.mxu0 %v407
      %518 = vmatprep.subr.mxu0 0.0
      %519 = vmatpush1.msra.mxu0 %v408
      %520 = vmatprep.subr.mxu0 0.0
      %521 = vmatpush1.msra.mxu0 %v409
      %522 = vmatprep.subr.mxu0 0.0
      %523 = vmatpush1.msra.mxu0 %v410
      %524 = vmatprep.subr.mxu0 0.0
      %525 = vmatpush1.msra.mxu0 %v411
      %526 = vmatprep.subr.mxu0 0.0
      %527 = vmatpush1.msra.mxu0 %v412
      %528 = vmatprep.subr.mxu0 0.0
      %529 = vmatpush1.msra.mxu0 %v413
      %530 = vmatprep.subr.mxu0 0.0
      %531 = vmatpush1.msra.mxu0 %v414
      %532 = vmatprep.subr.mxu0 0.0
      %533 = vmatpush1.msra.mxu0 %v415
      %534 = vmatprep.subr.mxu0 0.0
      %535 = vmatpush1.msra.mxu0 %v416
      %536 = vmatprep.subr.mxu0 0.0
      %537 = vmatpush1.msra.mxu0 %v417
      %538 = vmatprep.subr.mxu0 0.0
      %539 = vmatpush1.msra.mxu0 %v418
      %540 = vmatprep.subr.mxu0 0.0
      %541 = vmatpush1.msra.mxu0 %v419
      %542 = vmatprep.subr.mxu0 0.0
      %543 = vmatpush1.msra.mxu0 0.0
      %544 = vmatprep.subr.mxu0 0.0
      %545 = vmatpush1.msra.mxu0 0.0
      %546 = vmatprep.subr.mxu0 0.0
      %547 = vmatpush1.msra.mxu0 0.0
      %548 = vmatprep.subr.mxu0 0.0
      %549 = vmatpush1.msra.mxu0 0.0
      %550 = vmatprep.subr.mxu0 0.0
      %551 = vmatpush1.msra.mxu0 0.0
      %552 = vmatprep.subr.mxu0 0.0
      %553 = vmatpush1.msra.mxu0 0.0
      %554 = vmatprep.subr.mxu0 0.0
      %555 = vmatpush1.msra.mxu0 0.0
      %556 = vmatprep.subr.mxu0 0.0
      %557 = vmatpush1.msra.mxu0 0.0
      %558 = vmatprep.subr.mxu0 0.0
      %559 = vmatpush1.msra.mxu0 0.0
      %560 = vmatprep.subr.mxu0 0.0
      %561 = vmatpush1.msra.mxu0 0.0
      %562 = vmatprep.subr.mxu0 0.0
      %563 = vmatpush1.msra.mxu0 0.0
      %564 = vmatprep.subr.mxu0 0.0
      %565 = vmatpush1.msra.mxu0 0.0
      %566 = vmatprep.subr.mxu0 0.0
      %567 = vmatpush1.msra.mxu0 0.0
      %568 = vmatprep.subr.mxu0 0.0
      %569 = vmatpush1.msra.mxu0 0.0
      %570 = vmatprep.subr.mxu0 0.0
      %571 = vmatpush1.msra.mxu0 0.0
      %572 = vmatprep.subr.mxu0 0.0
      %573 = vmatpush1.msra.mxu0 0.0
      %574 = vmatprep.mubr.f32.mxu0 0.0
      %575 = vmatmul.mubr.f32.gmra.mrb[0].mxu0 %v439
      %v576 = vpop.f32.mrb[0].mxu0
      %v577 = vadd.f32 0.0, %v576
      %v578 = vpop.f32.mrb[0].mxu0
      %579 = vdwg.mxu0
      %v580 = vmul.f32 %v507, %v507
      %v581 = vsub.f32 %v577, %v580
      %v582 = vmax.f32 %v581, 0.0
      %v583 = vlaneseq
      %v584 = vshrl.u32 %v583, 7
      %v585 = vsub.s32 0, %v584
      %v586 = vrot.slane %v507, %v585
      %v587 = vsub.f32 %v420, %v586
      %v588 = vsub.f32 %v421, %v586
      %v589 = vadd.f32 %v582, 1e-06
      %v590 = vrsqrt.pop %v589
      %v591 = vlaneseq
      %v592 = vshrl.u32 %v591, 7
      %v593 = vsub.s32 0, %v592
      %v594 = vrot.slane %v590, %v593
      %v595 = vmul.f32 %v587, %v594
      %v596 = vmul.f32 %v588, %v594
      %v598 = vlaneseq
      %v599 = vshrl.u32 %v598, 7
      %v600 = vsub.s32 0, %v599
      %v601 = vrot.slane %v422, %v600
      %v603 = vmul.f32 %v595, %v601
      %v604 = vmul.f32 %v596, %v601
      %v606 = vlaneseq
      %v607 = vshrl.u32 %v606, 7
      %v608 = vsub.s32 0, %v607
      %v609 = vrot.slane %v423, %v608
      %v611 = vadd.f32 %v603, %v609
      %v612 = vadd.f32 %v604, %v609
      %v613 = vxor.u32 %v611, 2147483648
      %v614 = vxor.u32 %v612, 2147483648
      %v615 = vmul.f32 %v613, 1.442695
      %v616 = vpow.pop %v615
      %v617 = vmul.f32 %v614, 1.442695
      %v618 = vpow.pop %v617
      %v619 = vadd.f32 %v616, 1.0
      %v620 = vadd.f32 %v618, 1.0
      %v621 = vrcp.pop %v619
      %v622 = vmul.f32 1.0, %v621
      %v623 = vrcp.pop %v620
      %v624 = vmul.f32 1.0, %v623
      %v625 = vmul.f32 %v611, %v622
      %v626 = vmul.f32 %v612, %v624
      %v627 = vpack.c.bf16 %v626, %v625
      %v629 = vunpack.c.l.b16 %v627
      %v630 = vunpack.c.h.b16 %v627
      %v631 = vpack.c.b16 %v629, %v629
      %v632 = vpack.c.b16 %v630, %v630
      %vm633 = vcmask 1040384
      %vm634 = vcmask 1044484
      %vm635 = vmor %vm633, %vm634
      %v636 = vrot.slane %v631, 7
      %v637 = vrot.slane %v636, 4
      %v638 = vrot.slane %v632, 7
      %v639 = vsel %vm635, %v637, %v638
      %v640 = vrot.slane %v638, 4
      %644 = vst [vmem:[#allocation2] sm:$0xe] %v636
      %645 = vst [vmem:[#allocation2 + $0x4] sm:$0xf] %v639
      %646 = vst [vmem:[#allocation2 + $0x8] sm:$0x1] %v640
      %v647 = vld [vmem:[%s6] sm:$0x1]
      %v648 = vld [vmem:[#allocation2] sm:$0xf]
      %v649 = vld [vmem:[#allocation2 + $0x4] sm:$0xf]
      %v650 = vld [vmem:[%s5] sm:$0xf]
      %v651 = vld [vmem:[%s5 + $0x4] sm:$0xf]
      %v652 = vld [vmem:[%s5 + $0x8] sm:$0xf]
      %v653 = vld [vmem:[%s5 + $0xc] sm:$0xf]
      %v654 = vld [vmem:[%s5 + $0x10] sm:$0xf]
      %v655 = vld [vmem:[%s5 + $0x14] sm:$0xf]
      %v656 = vld [vmem:[%s5 + $0x18] sm:$0xf]
      %v657 = vld [vmem:[%s5 + $0x1c] sm:$0xf]
      %v658 = vld [vmem:[%s5 + $0x20] sm:$0xf]
      %v659 = vld [vmem:[%s5 + $0x24] sm:$0xf]
      %v660 = vld [vmem:[%s5 + $0x28] sm:$0xf]
      %v661 = vld [vmem:[%s5 + $0x2c] sm:$0xf]
      %v662 = vld [vmem:[%s5 + $0x30] sm:$0xf]
      %v663 = vld [vmem:[%s5 + $0x34] sm:$0xf]
      %v664 = vld [vmem:[%s5 + $0x38] sm:$0xf]
      %v665 = vld [vmem:[%s5 + $0x3c] sm:$0xf]
      %v666 = vld [vmem:[#allocation2 + $0x8] sm:$0x1]
      %s667 = scalar_lea.vmem %s5, 64
      %v668 = vld [vmem:[%s667] sm:$0xf]
      %v669 = vld [vmem:[%s667 + $0x4] sm:$0xf]
      %v670 = vld [vmem:[%s667 + $0x8] sm:$0xf]
      %v671 = vld [vmem:[%s667 + $0xc] sm:$0xf]
      %v672 = vld [vmem:[%s667 + $0x10] sm:$0xf]
      %v673 = vld [vmem:[%s667 + $0x14] sm:$0xf]
      %v674 = vld [vmem:[%s667 + $0x18] sm:$0xf]
      %v675 = vld [vmem:[%s667 + $0x1c] sm:$0xf]
      %v676 = vld [vmem:[%s667 + $0x20] sm:$0xf]
      %v677 = vld [vmem:[%s667 + $0x24] sm:$0xf]
      %v678 = vld [vmem:[%s667 + $0x28] sm:$0xf]
      %v679 = vld [vmem:[%s667 + $0x2c] sm:$0xf]
      %v680 = vld [vmem:[%s667 + $0x30] sm:$0xf]
      %v681 = vld [vmem:[%s667 + $0x34] sm:$0xf]
      %v682 = vld [vmem:[%s667 + $0x38] sm:$0xf]
      %v683 = vld [vmem:[%s667 + $0x3c] sm:$0xf]
      %v687 = vunpack.c.l.b16 %v648
      %v688 = vunpack.c.l.b16 %v649
      %v689 = vunpack.c.l.b16 %v666
      %v690 = vpack.c.b16 %v688, %v687
      %v691 = vpack.c.b16 %v689, %v689
      %vm692 = vsmask.f32 7424
      %v694 = vshrl.u32 %v690, 16
      %v696 = vshll.u32 %v690, 16
      %v698 = vrot.slane %v696, 1
      %v699 = vor.u32 %v694, %v698
      %v701 = vshll.u32 %v691, 16
      %v703 = vrot.slane %v701, 1
      %v704 = vsel %vm692, %v699, %v703
      %v722 = vunpack.c.l.b16 %v668
      %v723 = vunpack.c.l.b16 %v669
      %v724 = vunpack.c.l.b16 %v670
      %v725 = vunpack.c.l.b16 %v671
      %v726 = vunpack.c.l.b16 %v672
      %v727 = vunpack.c.l.b16 %v673
      %v728 = vunpack.c.l.b16 %v674
      %v729 = vunpack.c.l.b16 %v675
      %v730 = vunpack.c.l.b16 %v676
      %v731 = vunpack.c.l.b16 %v677
      %v732 = vunpack.c.l.b16 %v678
      %v733 = vunpack.c.l.b16 %v679
      %v734 = vunpack.c.l.b16 %v680
      %v735 = vunpack.c.l.b16 %v681
      %v736 = vunpack.c.l.b16 %v682
      %v737 = vunpack.c.l.b16 %v683
      %v738 = vpack.c.b16 %v723, %v722
      %v739 = vpack.c.b16 %v725, %v724
      %v740 = vpack.c.b16 %v727, %v726
      %v741 = vpack.c.b16 %v729, %v728
      %v742 = vpack.c.b16 %v731, %v730
      %v743 = vpack.c.b16 %v733, %v732
      %v744 = vpack.c.b16 %v735, %v734
      %v745 = vpack.c.b16 %v737, %v736
      %754 = vmatprep.subr.bf16.mxu0 0
      %755 = vmatpush1.bf16.msra.mxu0 %v738
      %756 = vmatprep.subr.bf16.mxu0 0
      %757 = vmatpush1.bf16.msra.mxu0 %v739
      %758 = vmatprep.subr.bf16.mxu0 0
      %759 = vmatpush1.bf16.msra.mxu0 %v740
      %760 = vmatprep.subr.bf16.mxu0 0
      %761 = vmatpush1.bf16.msra.mxu0 %v741
      %762 = vmatprep.subr.bf16.mxu0 0
      %763 = vmatpush1.bf16.msra.mxu0 %v742
      %764 = vmatprep.subr.bf16.mxu0 0
      %765 = vmatpush1.bf16.msra.mxu0 %v743
      %766 = vmatprep.subr.bf16.mxu0 0
      %767 = vmatpush1.bf16.msra.mxu0 %v744
      %768 = vmatprep.subr.bf16.mxu0 0
      %769 = vmatpush1.bf16.msra.mxu0 %v745
      %770 = vmatprep.subr.bf16.mxu0 0
      %771 = vmatpush1.bf16.msra.mxu0 0
      %772 = vmatprep.subr.bf16.mxu0 0
      %773 = vmatpush1.bf16.msra.mxu0 0
      %774 = vmatprep.subr.bf16.mxu0 0
      %775 = vmatpush1.bf16.msra.mxu0 0
      %776 = vmatprep.subr.bf16.mxu0 0
      %777 = vmatpush1.bf16.msra.mxu0 0
      %778 = vmatprep.subr.bf16.mxu0 0
      %779 = vmatpush1.bf16.msra.mxu0 0
      %780 = vmatprep.subr.bf16.mxu0 0
      %781 = vmatpush1.bf16.msra.mxu0 0
      %782 = vmatprep.subr.bf16.mxu0 0
      %783 = vmatpush1.bf16.msra.mxu0 0
      %784 = vmatprep.subr.bf16.mxu0 0
      %785 = vmatpush1.bf16.msra.mxu0 0
      %786 = vmatprep.mubr.bf16.mxu0 0
      %787 = vmatmul.mubr.bf16.gmra.mrb[0].mxu0 %v704
      %v788 = vpop.f32.mrb[0].mxu0
      %v789 = vadd.f32 0.0, %v788
      %v790 = vpop.f32.mrb[0].mxu0
      %v791 = vpop.f32.mrb[0].mxu0
      %v792 = vadd.f32 0.0, %v791
      %v793 = vpop.f32.mrb[0].mxu0
      %794 = vdwg.mxu0
      %v812 = vunpack.c.l.b16 %v650
      %v813 = vunpack.c.l.b16 %v651
      %v814 = vunpack.c.l.b16 %v652
      %v815 = vunpack.c.l.b16 %v653
      %v816 = vunpack.c.l.b16 %v654
      %v817 = vunpack.c.l.b16 %v655
      %v818 = vunpack.c.l.b16 %v656
      %v819 = vunpack.c.l.b16 %v657
      %v820 = vunpack.c.l.b16 %v658
      %v821 = vunpack.c.l.b16 %v659
      %v822 = vunpack.c.l.b16 %v660
      %v823 = vunpack.c.l.b16 %v661
      %v824 = vunpack.c.l.b16 %v662
      %v825 = vunpack.c.l.b16 %v663
      %v826 = vunpack.c.l.b16 %v664
      %v827 = vunpack.c.l.b16 %v665
      %v828 = vpack.c.b16 %v813, %v812
      %v829 = vpack.c.b16 %v815, %v814
      %v830 = vpack.c.b16 %v817, %v816
      %v831 = vpack.c.b16 %v819, %v818
      %v832 = vpack.c.b16 %v821, %v820
      %v833 = vpack.c.b16 %v823, %v822
      %v834 = vpack.c.b16 %v825, %v824
      %v835 = vpack.c.b16 %v827, %v826
      %844 = vmatprep.subr.bf16.mxu0 0
      %845 = vmatpush1.bf16.msra.mxu0 %v828
      %846 = vmatprep.subr.bf16.mxu0 0
      %847 = vmatpush1.bf16.msra.mxu0 %v829
      %848 = vmatprep.subr.bf16.mxu0 0
      %849 = vmatpush1.bf16.msra.mxu0 %v830
      %850 = vmatprep.subr.bf16.mxu0 0
      %851 = vmatpush1.bf16.msra.mxu0 %v831
      %852 = vmatprep.subr.bf16.mxu0 0
      %853 = vmatpush1.bf16.msra.mxu0 %v832
      %854 = vmatprep.subr.bf16.mxu0 0
      %855 = vmatpush1.bf16.msra.mxu0 %v833
      %856 = vmatprep.subr.bf16.mxu0 0
      %857 = vmatpush1.bf16.msra.mxu0 %v834
      %858 = vmatprep.subr.bf16.mxu0 0
      %859 = vmatpush1.bf16.msra.mxu0 %v835
      %860 = vmatprep.subr.bf16.mxu0 0
      %861 = vmatpush1.bf16.msra.mxu0 0
      %862 = vmatprep.subr.bf16.mxu0 0
      %863 = vmatpush1.bf16.msra.mxu0 0
      %864 = vmatprep.subr.bf16.mxu0 0
      %865 = vmatpush1.bf16.msra.mxu0 0
      %866 = vmatprep.subr.bf16.mxu0 0
      %867 = vmatpush1.bf16.msra.mxu0 0
      %868 = vmatprep.subr.bf16.mxu0 0
      %869 = vmatpush1.bf16.msra.mxu0 0
      %870 = vmatprep.subr.bf16.mxu0 0
      %871 = vmatpush1.bf16.msra.mxu0 0
      %872 = vmatprep.subr.bf16.mxu0 0
      %873 = vmatpush1.bf16.msra.mxu0 0
      %874 = vmatprep.subr.bf16.mxu0 0
      %875 = vmatpush1.bf16.msra.mxu0 0
      %876 = vmatprep.mubr.bf16.mxu0 0
      %877 = vmatmul.mubr.bf16.gmra.mrb[0].mxu0 %v690
      %v878 = vpop.f32.mrb[0].mxu0
      %v879 = vadd.f32 %v789, %v878
      %v880 = vpop.f32.mrb[0].mxu0
      %v881 = vpop.f32.mrb[0].mxu0
      %v882 = vadd.f32 %v792, %v881
      %v883 = vpop.f32.mrb[0].mxu0
      %884 = vdwg.mxu0
      %v885 = vld [vmem:[#allocation2] sm:$0xe]
      %s886 = scalar_lea.vmem %s5, 128
      %v887 = vld [vmem:[%s886] sm:$0xf]
      %v888 = vld [vmem:[%s886 + $0x4] sm:$0xf]
      %v889 = vld [vmem:[%s886 + $0x8] sm:$0xf]
      %v890 = vld [vmem:[%s886 + $0xc] sm:$0xf]
      %v891 = vld [vmem:[%s886 + $0x10] sm:$0xf]
      %v892 = vld [vmem:[%s886 + $0x14] sm:$0xf]
      %v893 = vld [vmem:[%s886 + $0x18] sm:$0xf]
      %v894 = vld [vmem:[%s886 + $0x1c] sm:$0xf]
      %v895 = vld [vmem:[%s886 + $0x20] sm:$0xf]
      %v896 = vld [vmem:[%s886 + $0x24] sm:$0xf]
      %v897 = vld [vmem:[%s886 + $0x28] sm:$0xf]
      %v898 = vld [vmem:[%s886 + $0x2c] sm:$0xf]
      %v899 = vld [vmem:[%s886 + $0x30] sm:$0xf]
      %v900 = vld [vmem:[%s886 + $0x34] sm:$0xf]
      %v901 = vld [vmem:[%s886 + $0x38] sm:$0xf]
      %v902 = vld [vmem:[%s886 + $0x3c] sm:$0xf]
      %v904 = vunpack.c.l.b16 %v885
      %v905 = vpack.c.b16 %v688, %v904
      %vm906 = vcmask 1046528
      %v907 = vrot.slane %v905, 1
      %v908 = vrot.slane %v691, 1
      %v909 = vsel %vm906, %v907, %v908
      %v927 = vunpack.c.l.b16 %v887
      %v928 = vunpack.c.l.b16 %v888
      %v929 = vunpack.c.l.b16 %v889
      %v930 = vunpack.c.l.b16 %v890
      %v931 = vunpack.c.l.b16 %v891
      %v932 = vunpack.c.l.b16 %v892
      %v933 = vunpack.c.l.b16 %v893
      %v934 = vunpack.c.l.b16 %v894
      %v935 = vunpack.c.l.b16 %v895
      %v936 = vunpack.c.l.b16 %v896
      %v937 = vunpack.c.l.b16 %v897
      %v938 = vunpack.c.l.b16 %v898
      %v939 = vunpack.c.l.b16 %v899
      %v940 = vunpack.c.l.b16 %v900
      %v941 = vunpack.c.l.b16 %v901
      %v942 = vunpack.c.l.b16 %v902
      %v943 = vpack.c.b16 %v928, %v927
      %v944 = vpack.c.b16 %v930, %v929
      %v945 = vpack.c.b16 %v932, %v931
      %v946 = vpack.c.b16 %v934, %v933
      %v947 = vpack.c.b16 %v936, %v935
      %v948 = vpack.c.b16 %v938, %v937
      %v949 = vpack.c.b16 %v940, %v939
      %v950 = vpack.c.b16 %v942, %v941
      %959 = vmatprep.subr.bf16.mxu0 0
      %960 = vmatpush1.bf16.msra.mxu0 %v943
      %961 = vmatprep.subr.bf16.mxu0 0
      %962 = vmatpush1.bf16.msra.mxu0 %v944
      %963 = vmatprep.subr.bf16.mxu0 0
      %964 = vmatpush1.bf16.msra.mxu0 %v945
      %965 = vmatprep.subr.bf16.mxu0 0
      %966 = vmatpush1.bf16.msra.mxu0 %v946
      %967 = vmatprep.subr.bf16.mxu0 0
      %968 = vmatpush1.bf16.msra.mxu0 %v947
      %969 = vmatprep.subr.bf16.mxu0 0
      %970 = vmatpush1.bf16.msra.mxu0 %v948
      %971 = vmatprep.subr.bf16.mxu0 0
      %972 = vmatpush1.bf16.msra.mxu0 %v949
      %973 = vmatprep.subr.bf16.mxu0 0
      %974 = vmatpush1.bf16.msra.mxu0 %v950
      %975 = vmatprep.subr.bf16.mxu0 0
      %976 = vmatpush1.bf16.msra.mxu0 0
      %977 = vmatprep.subr.bf16.mxu0 0
      %978 = vmatpush1.bf16.msra.mxu0 0
      %979 = vmatprep.subr.bf16.mxu0 0
      %980 = vmatpush1.bf16.msra.mxu0 0
      %981 = vmatprep.subr.bf16.mxu0 0
      %982 = vmatpush1.bf16.msra.mxu0 0
      %983 = vmatprep.subr.bf16.mxu0 0
      %984 = vmatpush1.bf16.msra.mxu0 0
      %985 = vmatprep.subr.bf16.mxu0 0
      %986 = vmatpush1.bf16.msra.mxu0 0
      %987 = vmatprep.subr.bf16.mxu0 0
      %988 = vmatpush1.bf16.msra.mxu0 0
      %989 = vmatprep.subr.bf16.mxu0 0
      %990 = vmatpush1.bf16.msra.mxu0 0
      %991 = vmatprep.mubr.bf16.mxu0 0
      %992 = vmatmul.mubr.bf16.gmra.mrb[0].mxu0 %v909
      %v993 = vpop.f32.mrb[0].mxu0
      %v994 = vadd.f32 0.0, %v993
      %v995 = vpop.f32.mrb[0].mxu0
      %v996 = vpop.f32.mrb[0].mxu0
      %v997 = vadd.f32 0.0, %v996
      %v998 = vpop.f32.mrb[0].mxu0
      %999 = vdwg.mxu0
      %v1000 = vadd.f32 %v879, %v994
      %v1001 = vadd.f32 %v882, %v997
      %v1002 = vld [vmem:[#allocation2 + $0x8] sm:$0x3]
      %s1003 = scalar_lea.vmem %s5, 192
      %v1004 = vld [vmem:[%s1003] sm:$0xf]
      %v1005 = vld [vmem:[%s1003 + $0x4] sm:$0xf]
      %v1006 = vld [vmem:[%s1003 + $0x8] sm:$0xf]
      %v1007 = vld [vmem:[%s1003 + $0xc] sm:$0xf]
      %v1008 = vld [vmem:[%s1003 + $0x10] sm:$0xf]
      %v1009 = vld [vmem:[%s1003 + $0x14] sm:$0xf]
      %v1010 = vld [vmem:[%s1003 + $0x18] sm:$0xf]
      %v1011 = vld [vmem:[%s1003 + $0x1c] sm:$0xf]
      %v1012 = vld [vmem:[%s1003 + $0x20] sm:$0xf]
      %v1013 = vld [vmem:[%s1003 + $0x24] sm:$0xf]
      %v1014 = vld [vmem:[%s1003 + $0x28] sm:$0xf]
      %v1015 = vld [vmem:[%s1003 + $0x2c] sm:$0xf]
      %v1016 = vld [vmem:[%s1003 + $0x30] sm:$0xf]
      %v1017 = vld [vmem:[%s1003 + $0x34] sm:$0xf]
      %v1018 = vld [vmem:[%s1003 + $0x38] sm:$0xf]
      %v1019 = vld [vmem:[%s1003 + $0x3c] sm:$0xf]
      %v1021 = vunpack.c.l.b16 %v1002
      %v1022 = vpack.c.b16 %v1021, %v1021
      %vm1023 = vsmask.f32 6400
      %v1025 = vshrl.u32 %v905, 16
      %v1027 = vrot.slane %v1025, 1
      %v1028 = vshll.u32 %v905, 16
      %v1030 = vrot.slane %v1028, 2
      %v1031 = vor.u32 %v1027, %v1030
      %v1033 = vshrl.u32 %v1022, 16
      %v1035 = vrot.slane %v1033, 1
      %v1036 = vshll.u32 %v1022, 16
      %v1038 = vrot.slane %v1036, 2
      %v1039 = vor.u32 %v1035, %v1038
      %v1040 = vsel %vm1023, %v1031, %v1039
      %v1058 = vunpack.c.l.b16 %v1004
      %v1059 = vunpack.c.l.b16 %v1005
      %v1060 = vunpack.c.l.b16 %v1006
      %v1061 = vunpack.c.l.b16 %v1007
      %v1062 = vunpack.c.l.b16 %v1008
      %v1063 = vunpack.c.l.b16 %v1009
      %v1064 = vunpack.c.l.b16 %v1010
      %v1065 = vunpack.c.l.b16 %v1011
      %v1066 = vunpack.c.l.b16 %v1012
      %v1067 = vunpack.c.l.b16 %v1013
      %v1068 = vunpack.c.l.b16 %v1014
      %v1069 = vunpack.c.l.b16 %v1015
      %v1070 = vunpack.c.l.b16 %v1016
      %v1071 = vunpack.c.l.b16 %v1017
      %v1072 = vunpack.c.l.b16 %v1018
      %v1073 = vunpack.c.l.b16 %v1019
      %v1074 = vpack.c.b16 %v1059, %v1058
      %v1075 = vpack.c.b16 %v1061, %v1060
      %v1076 = vpack.c.b16 %v1063, %v1062
      %v1077 = vpack.c.b16 %v1065, %v1064
      %v1078 = vpack.c.b16 %v1067, %v1066
      %v1079 = vpack.c.b16 %v1069, %v1068
      %v1080 = vpack.c.b16 %v1071, %v1070
      %v1081 = vpack.c.b16 %v1073, %v1072
      %1090 = vmatprep.subr.bf16.mxu0 0
      %1091 = vmatpush1.bf16.msra.mxu0 %v1074
      %1092 = vmatprep.subr.bf16.mxu0 0
      %1093 = vmatpush1.bf16.msra.mxu0 %v1075
      %1094 = vmatprep.subr.bf16.mxu0 0
      %1095 = vmatpush1.bf16.msra.mxu0 %v1076
      %1096 = vmatprep.subr.bf16.mxu0 0
      %1097 = vmatpush1.bf16.msra.mxu0 %v1077
      %1098 = vmatprep.subr.bf16.mxu0 0
      %1099 = vmatpush1.bf16.msra.mxu0 %v1078
      %1100 = vmatprep.subr.bf16.mxu0 0
      %1101 = vmatpush1.bf16.msra.mxu0 %v1079
      %1102 = vmatprep.subr.bf16.mxu0 0
      %1103 = vmatpush1.bf16.msra.mxu0 %v1080
      %1104 = vmatprep.subr.bf16.mxu0 0
      %1105 = vmatpush1.bf16.msra.mxu0 %v1081
      %1106 = vmatprep.subr.bf16.mxu0 0
      %1107 = vmatpush1.bf16.msra.mxu0 0
      %1108 = vmatprep.subr.bf16.mxu0 0
      %1109 = vmatpush1.bf16.msra.mxu0 0
      %1110 = vmatprep.subr.bf16.mxu0 0
      %1111 = vmatpush1.bf16.msra.mxu0 0
      %1112 = vmatprep.subr.bf16.mxu0 0
      %1113 = vmatpush1.bf16.msra.mxu0 0
      %1114 = vmatprep.subr.bf16.mxu0 0
      %1115 = vmatpush1.bf16.msra.mxu0 0
      %1116 = vmatprep.subr.bf16.mxu0 0
      %1117 = vmatpush1.bf16.msra.mxu0 0
      %1118 = vmatprep.subr.bf16.mxu0 0
      %1119 = vmatpush1.bf16.msra.mxu0 0
      %1120 = vmatprep.subr.bf16.mxu0 0
      %1121 = vmatpush1.bf16.msra.mxu0 0
      %1122 = vmatprep.mubr.bf16.mxu0 0
      %1123 = vmatmul.mubr.bf16.gmra.mrb[0].mxu0 %v1040
      %v1124 = vpop.f32.mrb[0].mxu0
      %v1125 = vadd.f32 0.0, %v1124
      %v1126 = vpop.f32.mrb[0].mxu0
      %v1127 = vpop.f32.mrb[0].mxu0
      %v1128 = vadd.f32 0.0, %v1127
      %v1129 = vpop.f32.mrb[0].mxu0
      %1130 = vdwg.mxu0
      %v1131 = vadd.f32 %v1000, %v1125
      %v1132 = vadd.f32 %v1001, %v1128
      %v1133 = vld [vmem:[#allocation2] sm:$0xc]
      %s1134 = scalar_lea.vmem %s5, 256
      %v1135 = vld [vmem:[%s1134] sm:$0xf]
      %v1136 = vld [vmem:[%s1134 + $0x4] sm:$0xf]
      %v1137 = vld [vmem:[%s1134 + $0x8] sm:$0xf]
      %v1138 = vld [vmem:[%s1134 + $0xc] sm:$0xf]
      %v1139 = vld [vmem:[%s1134 + $0x10] sm:$0xf]
      %v1140 = vld [vmem:[%s1134 + $0x14] sm:$0xf]
      %v1141 = vld [vmem:[%s1134 + $0x18] sm:$0xf]
      %v1142 = vld [vmem:[%s1134 + $0x1c] sm:$0xf]
      %v1143 = vld [vmem:[%s1134 + $0x20] sm:$0xf]
      %v1144 = vld [vmem:[%s1134 + $0x24] sm:$0xf]
      %v1145 = vld [vmem:[%s1134 + $0x28] sm:$0xf]
      %v1146 = vld [vmem:[%s1134 + $0x2c] sm:$0xf]
      %v1147 = vld [vmem:[%s1134 + $0x30] sm:$0xf]
      %v1148 = vld [vmem:[%s1134 + $0x34] sm:$0xf]
      %v1149 = vld [vmem:[%s1134 + $0x38] sm:$0xf]
      %v1150 = vld [vmem:[%s1134 + $0x3c] sm:$0xf]
      %v1152 = vunpack.c.l.b16 %v1133
      %v1153 = vpack.c.b16 %v688, %v1152
      %vm1154 = vcmask 1045504
      %v1155 = vrot.slane %v1153, 2
      %v1156 = vrot.slane %v1022, 2
      %v1157 = vsel %vm1154, %v1155, %v1156
      %v1175 = vunpack.c.l.b16 %v1135
      %v1176 = vunpack.c.l.b16 %v1136
      %v1177 = vunpack.c.l.b16 %v1137
      %v1178 = vunpack.c.l.b16 %v1138
      %v1179 = vunpack.c.l.b16 %v1139
      %v1180 = vunpack.c.l.b16 %v1140
      %v1181 = vunpack.c.l.b16 %v1141
      %v1182 = vunpack.c.l.b16 %v1142
      %v1183 = vunpack.c.l.b16 %v1143
      %v1184 = vunpack.c.l.b16 %v1144
      %v1185 = vunpack.c.l.b16 %v1145
      %v1186 = vunpack.c.l.b16 %v1146
      %v1187 = vunpack.c.l.b16 %v1147
      %v1188 = vunpack.c.l.b16 %v1148
      %v1189 = vunpack.c.l.b16 %v1149
      %v1190 = vunpack.c.l.b16 %v1150
      %v1191 = vpack.c.b16 %v1176, %v1175
      %v1192 = vpack.c.b16 %v1178, %v1177
      %v1193 = vpack.c.b16 %v1180, %v1179
      %v1194 = vpack.c.b16 %v1182, %v1181
      %v1195 = vpack.c.b16 %v1184, %v1183
      %v1196 = vpack.c.b16 %v1186, %v1185
      %v1197 = vpack.c.b16 %v1188, %v1187
      %v1198 = vpack.c.b16 %v1190, %v1189
      %1207 = vmatprep.subr.bf16.mxu0 0
      %1208 = vmatpush1.bf16.msra.mxu0 %v1191
      %1209 = vmatprep.subr.bf16.mxu0 0
      %1210 = vmatpush1.bf16.msra.mxu0 %v1192
      %1211 = vmatprep.subr.bf16.mxu0 0
      %1212 = vmatpush1.bf16.msra.mxu0 %v1193
      %1213 = vmatprep.subr.bf16.mxu0 0
      %1214 = vmatpush1.bf16.msra.mxu0 %v1194
      %1215 = vmatprep.subr.bf16.mxu0 0
      %1216 = vmatpush1.bf16.msra.mxu0 %v1195
      %1217 = vmatprep.subr.bf16.mxu0 0
      %1218 = vmatpush1.bf16.msra.mxu0 %v1196
      %1219 = vmatprep.subr.bf16.mxu0 0
      %1220 = vmatpush1.bf16.msra.mxu0 %v1197
      %1221 = vmatprep.subr.bf16.mxu0 0
      %1222 = vmatpush1.bf16.msra.mxu0 %v1198
      %1223 = vmatprep.subr.bf16.mxu0 0
      %1224 = vmatpush1.bf16.msra.mxu0 0
      %1225 = vmatprep.subr.bf16.mxu0 0
      %1226 = vmatpush1.bf16.msra.mxu0 0
      %1227 = vmatprep.subr.bf16.mxu0 0
      %1228 = vmatpush1.bf16.msra.mxu0 0
      %1229 = vmatprep.subr.bf16.mxu0 0
      %1230 = vmatpush1.bf16.msra.mxu0 0
      %1231 = vmatprep.subr.bf16.mxu0 0
      %1232 = vmatpush1.bf16.msra.mxu0 0
      %1233 = vmatprep.subr.bf16.mxu0 0
      %1234 = vmatpush1.bf16.msra.mxu0 0
      %1235 = vmatprep.subr.bf16.mxu0 0
      %1236 = vmatpush1.bf16.msra.mxu0 0
      %1237 = vmatprep.subr.bf16.mxu0 0
      %1238 = vmatpush1.bf16.msra.mxu0 0
      %1239 = vmatprep.mubr.bf16.mxu0 0
      %1240 = vmatmul.mubr.bf16.gmra.mrb[0].mxu0 %v1157
      %v1241 = vpop.f32.mrb[0].mxu0
      %v1242 = vadd.f32 0.0, %v1241
      %v1243 = vpop.f32.mrb[0].mxu0
      %v1244 = vpop.f32.mrb[0].mxu0
      %v1245 = vadd.f32 0.0, %v1244
      %v1246 = vpop.f32.mrb[0].mxu0
      %1247 = vdwg.mxu0
      %v1248 = vadd.f32 %v1131, %v1242
      %v1249 = vadd.f32 %v1132, %v1245
      %v1251 = vlaneseq
      %v1252 = vshrl.u32 %v1251, 7
      %v1253 = vsub.s32 0, %v1252
      %v1254 = vrot.slane %v647, %v1253
      %v1256 = vadd.f32 %v1248, %v1254
      %v1257 = vadd.f32 %v1249, %v1254
      %v1258 = vld [vmem:[%s395] sm:$0x1]
      %v1260 = vlaneseq
      %v1261 = vshrl.u32 %v1260, 7
      %v1262 = vsub.s32 0, %v1261
      %v1263 = vrot.slane %v1258, %v1262
      %v1265 = vadd.f32 %v1256, %v1263
      %v1266 = vadd.f32 %v1257, %v1263
      %v1267 = vld [vmem:[%s7] sm:$0x1]
      %v1268 = vld [vmem:[%s8] sm:$0x1]
      %v1269 = vadd.f32 %v1265, %v1266
      %v1270 = vrot.slane %v1269, 4
      %v1271 = vadd.f32 %v1269, %v1270
      %v1272 = vrot.slane %v1271, 2
      %v1273 = vadd.f32 %v1271, %v1272
      %v1274 = vrot.slane %v1273, 1
      %v1275 = vadd.f32 %v1273, %v1274
      %v1276 = vmul.f32 %v1265, %v1265
      %v1277 = vmul.f32 %v1266, %v1266
      %v1278 = vadd.f32 %v1276, %v1277
      %v1279 = vrot.slane %v1278, 4
      %v1280 = vadd.f32 %v1278, %v1279
      %v1281 = vrot.slane %v1280, 2
      %v1282 = vadd.f32 %v1280, %v1281
      %v1283 = vrot.slane %v1282, 1
      %v1284 = vadd.f32 %v1282, %v1283
      %1285 = vmatprep.subr.mxu0 0.0
      %1286 = vmatpush1.msra.mxu0 %v404
      %1287 = vmatprep.subr.mxu0 0.0
      %1288 = vmatpush1.msra.mxu0 %v405
      %1289 = vmatprep.subr.mxu0 0.0
      %1290 = vmatpush1.msra.mxu0 %v406
      %1291 = vmatprep.subr.mxu0 0.0
      %1292 = vmatpush1.msra.mxu0 %v407
      %1293 = vmatprep.subr.mxu0 0.0
      %1294 = vmatpush1.msra.mxu0 %v408
      %1295 = vmatprep.subr.mxu0 0.0
      %1296 = vmatpush1.msra.mxu0 %v409
      %1297 = vmatprep.subr.mxu0 0.0
      %1298 = vmatpush1.msra.mxu0 %v410
      %1299 = vmatprep.subr.mxu0 0.0
      %1300 = vmatpush1.msra.mxu0 %v411
      %1301 = vmatprep.subr.mxu0 0.0
      %1302 = vmatpush1.msra.mxu0 %v412
      %1303 = vmatprep.subr.mxu0 0.0
      %1304 = vmatpush1.msra.mxu0 %v413
      %1305 = vmatprep.subr.mxu0 0.0
      %1306 = vmatpush1.msra.mxu0 %v414
      %1307 = vmatprep.subr.mxu0 0.0
      %1308 = vmatpush1.msra.mxu0 %v415
      %1309 = vmatprep.subr.mxu0 0.0
      %1310 = vmatpush1.msra.mxu0 %v416
      %1311 = vmatprep.subr.mxu0 0.0
      %1312 = vmatpush1.msra.mxu0 %v417
      %1313 = vmatprep.subr.mxu0 0.0
      %1314 = vmatpush1.msra.mxu0 %v418
      %1315 = vmatprep.subr.mxu0 0.0
      %1316 = vmatpush1.msra.mxu0 %v419
      %1317 = vmatprep.subr.mxu0 0.0
      %1318 = vmatpush1.msra.mxu0 0.0
      %1319 = vmatprep.subr.mxu0 0.0
      %1320 = vmatpush1.msra.mxu0 0.0
      %1321 = vmatprep.subr.mxu0 0.0
      %1322 = vmatpush1.msra.mxu0 0.0
      %1323 = vmatprep.subr.mxu0 0.0
      %1324 = vmatpush1.msra.mxu0 0.0
      %1325 = vmatprep.subr.mxu0 0.0
      %1326 = vmatpush1.msra.mxu0 0.0
      %1327 = vmatprep.subr.mxu0 0.0
      %1328 = vmatpush1.msra.mxu0 0.0
      %1329 = vmatprep.subr.mxu0 0.0
      %1330 = vmatpush1.msra.mxu0 0.0
      %1331 = vmatprep.subr.mxu0 0.0
      %1332 = vmatpush1.msra.mxu0 0.0
      %1333 = vmatprep.subr.mxu0 0.0
      %1334 = vmatpush1.msra.mxu0 0.0
      %1335 = vmatprep.subr.mxu0 0.0
      %1336 = vmatpush1.msra.mxu0 0.0
      %1337 = vmatprep.subr.mxu0 0.0
      %1338 = vmatpush1.msra.mxu0 0.0
      %1339 = vmatprep.subr.mxu0 0.0
      %1340 = vmatpush1.msra.mxu0 0.0
      %1341 = vmatprep.subr.mxu0 0.0
      %1342 = vmatpush1.msra.mxu0 0.0
      %1343 = vmatprep.subr.mxu0 0.0
      %1344 = vmatpush1.msra.mxu0 0.0
      %1345 = vmatprep.subr.mxu0 0.0
      %1346 = vmatpush1.msra.mxu0 0.0
      %1347 = vmatprep.subr.mxu0 0.0
      %1348 = vmatpush1.msra.mxu0 0.0
      %1349 = vmatprep.mubr.f32.mxu0 0.0
      %1350 = vmatmul.mubr.f32.gmra.mrb[0].mxu0 %v1275
      %v1351 = vpop.f32.mrb[0].mxu0
      %v1352 = vadd.f32 0.0, %v1351
      %v1353 = vpop.f32.mrb[0].mxu0
      %1354 = vdwg.mxu0
      %1355 = vmatprep.subr.mxu0 0.0
      %1356 = vmatpush1.msra.mxu0 %v404
      %1357 = vmatprep.subr.mxu0 0.0
      %1358 = vmatpush1.msra.mxu0 %v405
      %1359 = vmatprep.subr.mxu0 0.0
      %1360 = vmatpush1.msra.mxu0 %v406
      %1361 = vmatprep.subr.mxu0 0.0
      %1362 = vmatpush1.msra.mxu0 %v407
      %1363 = vmatprep.subr.mxu0 0.0
      %1364 = vmatpush1.msra.mxu0 %v408
      %1365 = vmatprep.subr.mxu0 0.0
      %1366 = vmatpush1.msra.mxu0 %v409
      %1367 = vmatprep.subr.mxu0 0.0
      %1368 = vmatpush1.msra.mxu0 %v410
      %1369 = vmatprep.subr.mxu0 0.0
      %1370 = vmatpush1.msra.mxu0 %v411
      %1371 = vmatprep.subr.mxu0 0.0
      %1372 = vmatpush1.msra.mxu0 %v412
      %1373 = vmatprep.subr.mxu0 0.0
      %1374 = vmatpush1.msra.mxu0 %v413
      %1375 = vmatprep.subr.mxu0 0.0
      %1376 = vmatpush1.msra.mxu0 %v414
      %1377 = vmatprep.subr.mxu0 0.0
      %1378 = vmatpush1.msra.mxu0 %v415
      %1379 = vmatprep.subr.mxu0 0.0
      %1380 = vmatpush1.msra.mxu0 %v416
      %1381 = vmatprep.subr.mxu0 0.0
      %1382 = vmatpush1.msra.mxu0 %v417
      %1383 = vmatprep.subr.mxu0 0.0
      %1384 = vmatpush1.msra.mxu0 %v418
      %1385 = vmatprep.subr.mxu0 0.0
      %1386 = vmatpush1.msra.mxu0 %v419
      %1387 = vmatprep.subr.mxu0 0.0
      %1388 = vmatpush1.msra.mxu0 0.0
      %1389 = vmatprep.subr.mxu0 0.0
      %1390 = vmatpush1.msra.mxu0 0.0
      %1391 = vmatprep.subr.mxu0 0.0
      %1392 = vmatpush1.msra.mxu0 0.0
      %1393 = vmatprep.subr.mxu0 0.0
      %1394 = vmatpush1.msra.mxu0 0.0
      %1395 = vmatprep.subr.mxu0 0.0
      %1396 = vmatpush1.msra.mxu0 0.0
      %1397 = vmatprep.subr.mxu0 0.0
      %1398 = vmatpush1.msra.mxu0 0.0
      %1399 = vmatprep.subr.mxu0 0.0
      %1400 = vmatpush1.msra.mxu0 0.0
      %1401 = vmatprep.subr.mxu0 0.0
      %1402 = vmatpush1.msra.mxu0 0.0
      %1403 = vmatprep.subr.mxu0 0.0
      %1404 = vmatpush1.msra.mxu0 0.0
      %1405 = vmatprep.subr.mxu0 0.0
      %1406 = vmatpush1.msra.mxu0 0.0
      %1407 = vmatprep.subr.mxu0 0.0
      %1408 = vmatpush1.msra.mxu0 0.0
      %1409 = vmatprep.subr.mxu0 0.0
      %1410 = vmatpush1.msra.mxu0 0.0
      %1411 = vmatprep.subr.mxu0 0.0
      %1412 = vmatpush1.msra.mxu0 0.0
      %1413 = vmatprep.subr.mxu0 0.0
      %1414 = vmatpush1.msra.mxu0 0.0
      %1415 = vmatprep.subr.mxu0 0.0
      %1416 = vmatpush1.msra.mxu0 0.0
      %1417 = vmatprep.subr.mxu0 0.0
      %1418 = vmatpush1.msra.mxu0 0.0
      %1419 = vmatprep.mubr.f32.mxu0 0.0
      %1420 = vmatmul.mubr.f32.gmra.mrb[0].mxu0 %v1284
      %v1421 = vpop.f32.mrb[0].mxu0
      %v1422 = vadd.f32 0.0, %v1421
      %v1423 = vpop.f32.mrb[0].mxu0
      %1424 = vdwg.mxu0
      %v1425 = vmul.f32 %v1352, %v1352
      %v1426 = vsub.f32 %v1422, %v1425
      %v1427 = vmax.f32 %v1426, 0.0
      %v1428 = vlaneseq
      %v1429 = vshrl.u32 %v1428, 7
      %v1430 = vsub.s32 0, %v1429
      %v1431 = vrot.slane %v1352, %v1430
      %v1432 = vsub.f32 %v1265, %v1431
      %v1433 = vsub.f32 %v1266, %v1431
      %v1434 = vadd.f32 %v1427, 1e-06
      %v1435 = vrsqrt.pop %v1434
      %v1436 = vlaneseq
      %v1437 = vshrl.u32 %v1436, 7
      %v1438 = vsub.s32 0, %v1437
      %v1439 = vrot.slane %v1435, %v1438
      %v1440 = vmul.f32 %v1432, %v1439
      %v1441 = vmul.f32 %v1433, %v1439
      %v1443 = vlaneseq
      %v1444 = vshrl.u32 %v1443, 7
      %v1445 = vsub.s32 0, %v1444
      %v1446 = vrot.slane %v1267, %v1445
      %v1448 = vmul.f32 %v1440, %v1446
      %v1449 = vmul.f32 %v1441, %v1446
      %v1451 = vlaneseq
      %v1452 = vshrl.u32 %v1451, 7
      %v1453 = vsub.s32 0, %v1452
      %v1454 = vrot.slane %v1268, %v1453
      %v1456 = vadd.f32 %v1448, %v1454
      %v1457 = vadd.f32 %v1449, %v1454
      %v1458 = vxor.u32 %v1456, 2147483648
      %v1459 = vxor.u32 %v1457, 2147483648
      %v1460 = vmul.f32 %v1458, 1.442695
      %v1461 = vpow.pop %v1460
      %v1462 = vmul.f32 %v1459, 1.442695
      %v1463 = vpow.pop %v1462
      %v1464 = vadd.f32 %v1461, 1.0
      %v1465 = vadd.f32 %v1463, 1.0
      %v1466 = vrcp.pop %v1464
      %v1467 = vmul.f32 1.0, %v1466
      %v1468 = vrcp.pop %v1465
      %v1469 = vmul.f32 1.0, %v1468
      %v1470 = vmul.f32 %v1456, %v1467
      %v1471 = vmul.f32 %v1457, %v1469
      %v1472 = vpack.c.bf16 %v1471, %v1470
      %v1474 = vunpack.c.l.b16 %v1472
      %v1475 = vunpack.c.h.b16 %v1472
      %v1476 = vpack.c.b16 %v1474, %v1474
      %v1477 = vpack.c.b16 %v1475, %v1475
      %v1478 = vrot.slane %v1476, 7
      %v1479 = vrot.slane %v1478, 4
      %v1480 = vrot.slane %v1477, 7
      %v1481 = vsel %vm635, %v1479, %v1480
      %v1482 = vrot.slane %v1480, 4
      %1486 = vst [vmem:[#allocation2] sm:$0xe] %v1478
      %1487 = vst [vmem:[#allocation2 + $0x4] sm:$0xf] %v1481
      %1488 = vst [vmem:[#allocation2 + $0x8] sm:$0x1] %v1482
      %v1489 = vld [vmem:[%s10] sm:$0x1]
      %v1490 = vld [vmem:[#allocation2] sm:$0xf]
      %v1491 = vld [vmem:[#allocation2 + $0x4] sm:$0xf]
      %v1492 = vld [vmem:[%s9] sm:$0xf]
      %v1493 = vld [vmem:[%s9 + $0x4] sm:$0xf]
      %v1494 = vld [vmem:[%s9 + $0x8] sm:$0xf]
      %v1495 = vld [vmem:[%s9 + $0xc] sm:$0xf]
      %v1496 = vld [vmem:[%s9 + $0x10] sm:$0xf]
      %v1497 = vld [vmem:[%s9 + $0x14] sm:$0xf]
      %v1498 = vld [vmem:[%s9 + $0x18] sm:$0xf]
      %v1499 = vld [vmem:[%s9 + $0x1c] sm:$0xf]
      %v1500 = vld [vmem:[%s9 + $0x20] sm:$0xf]
      %v1501 = vld [vmem:[%s9 + $0x24] sm:$0xf]
      %v1502 = vld [vmem:[%s9 + $0x28] sm:$0xf]
      %v1503 = vld [vmem:[%s9 + $0x2c] sm:$0xf]
      %v1504 = vld [vmem:[%s9 + $0x30] sm:$0xf]
      %v1505 = vld [vmem:[%s9 + $0x34] sm:$0xf]
      %v1506 = vld [vmem:[%s9 + $0x38] sm:$0xf]
      %v1507 = vld [vmem:[%s9 + $0x3c] sm:$0xf]
      %v1508 = vld [vmem:[#allocation2 + $0x8] sm:$0x1]
      %s1509 = scalar_lea.vmem %s9, 64
      %v1510 = vld [vmem:[%s1509] sm:$0xf]
      %v1511 = vld [vmem:[%s1509 + $0x4] sm:$0xf]
      %v1512 = vld [vmem:[%s1509 + $0x8] sm:$0xf]
      %v1513 = vld [vmem:[%s1509 + $0xc] sm:$0xf]
      %v1514 = vld [vmem:[%s1509 + $0x10] sm:$0xf]
      %v1515 = vld [vmem:[%s1509 + $0x14] sm:$0xf]
      %v1516 = vld [vmem:[%s1509 + $0x18] sm:$0xf]
      %v1517 = vld [vmem:[%s1509 + $0x1c] sm:$0xf]
      %v1518 = vld [vmem:[%s1509 + $0x20] sm:$0xf]
      %v1519 = vld [vmem:[%s1509 + $0x24] sm:$0xf]
      %v1520 = vld [vmem:[%s1509 + $0x28] sm:$0xf]
      %v1521 = vld [vmem:[%s1509 + $0x2c] sm:$0xf]
      %v1522 = vld [vmem:[%s1509 + $0x30] sm:$0xf]
      %v1523 = vld [vmem:[%s1509 + $0x34] sm:$0xf]
      %v1524 = vld [vmem:[%s1509 + $0x38] sm:$0xf]
      %v1525 = vld [vmem:[%s1509 + $0x3c] sm:$0xf]
      %v1529 = vunpack.c.l.b16 %v1490
      %v1530 = vunpack.c.l.b16 %v1491
      %v1531 = vunpack.c.l.b16 %v1508
      %v1532 = vpack.c.b16 %v1530, %v1529
      %v1533 = vpack.c.b16 %v1531, %v1531
      %v1535 = vshrl.u32 %v1532, 16
      %v1537 = vshll.u32 %v1532, 16
      %v1539 = vrot.slane %v1537, 1
      %v1540 = vor.u32 %v1535, %v1539
      %v1542 = vshll.u32 %v1533, 16
      %v1544 = vrot.slane %v1542, 1
      %v1545 = vsel %vm692, %v1540, %v1544
      %v1563 = vunpack.c.l.b16 %v1510
      %v1564 = vunpack.c.l.b16 %v1511
      %v1565 = vunpack.c.l.b16 %v1512
      %v1566 = vunpack.c.l.b16 %v1513
      %v1567 = vunpack.c.l.b16 %v1514
      %v1568 = vunpack.c.l.b16 %v1515
      %v1569 = vunpack.c.l.b16 %v1516
      %v1570 = vunpack.c.l.b16 %v1517
      %v1571 = vunpack.c.l.b16 %v1518
      %v1572 = vunpack.c.l.b16 %v1519
      %v1573 = vunpack.c.l.b16 %v1520
      %v1574 = vunpack.c.l.b16 %v1521
      %v1575 = vunpack.c.l.b16 %v1522
      %v1576 = vunpack.c.l.b16 %v1523
      %v1577 = vunpack.c.l.b16 %v1524
      %v1578 = vunpack.c.l.b16 %v1525
      %v1579 = vpack.c.b16 %v1564, %v1563
      %v1580 = vpack.c.b16 %v1566, %v1565
      %v1581 = vpack.c.b16 %v1568, %v1567
      %v1582 = vpack.c.b16 %v1570, %v1569
      %v1583 = vpack.c.b16 %v1572, %v1571
      %v1584 = vpack.c.b16 %v1574, %v1573
      %v1585 = vpack.c.b16 %v1576, %v1575
      %v1586 = vpack.c.b16 %v1578, %v1577
      %1595 = vmatprep.subr.bf16.mxu0 0
      %1596 = vmatpush1.bf16.msra.mxu0 %v1579
      %1597 = vmatprep.subr.bf16.mxu0 0
      %1598 = vmatpush1.bf16.msra.mxu0 %v1580
      %1599 = vmatprep.subr.bf16.mxu0 0
      %1600 = vmatpush1.bf16.msra.mxu0 %v1581
      %1601 = vmatprep.subr.bf16.mxu0 0
      %1602 = vmatpush1.bf16.msra.mxu0 %v1582
      %1603 = vmatprep.subr.bf16.mxu0 0
      %1604 = vmatpush1.bf16.msra.mxu0 %v1583
      %1605 = vmatprep.subr.bf16.mxu0 0
      %1606 = vmatpush1.bf16.msra.mxu0 %v1584
      %1607 = vmatprep.subr.bf16.mxu0 0
      %1608 = vmatpush1.bf16.msra.mxu0 %v1585
      %1609 = vmatprep.subr.bf16.mxu0 0
      %1610 = vmatpush1.bf16.msra.mxu0 %v1586
      %1611 = vmatprep.subr.bf16.mxu0 0
      %1612 = vmatpush1.bf16.msra.mxu0 0
      %1613 = vmatprep.subr.bf16.mxu0 0
      %1614 = vmatpush1.bf16.msra.mxu0 0
      %1615 = vmatprep.subr.bf16.mxu0 0
      %1616 = vmatpush1.bf16.msra.mxu0 0
      %1617 = vmatprep.subr.bf16.mxu0 0
      %1618 = vmatpush1.bf16.msra.mxu0 0
      %1619 = vmatprep.subr.bf16.mxu0 0
      %1620 = vmatpush1.bf16.msra.mxu0 0
      %1621 = vmatprep.subr.bf16.mxu0 0
      %1622 = vmatpush1.bf16.msra.mxu0 0
      %1623 = vmatprep.subr.bf16.mxu0 0
      %1624 = vmatpush1.bf16.msra.mxu0 0
      %1625 = vmatprep.subr.bf16.mxu0 0
      %1626 = vmatpush1.bf16.msra.mxu0 0
      %1627 = vmatprep.mubr.bf16.mxu0 0
      %1628 = vmatmul.mubr.bf16.gmra.mrb[0].mxu0 %v1545
      %v1629 = vpop.f32.mrb[0].mxu0
      %v1630 = vadd.f32 0.0, %v1629
      %v1631 = vpop.f32.mrb[0].mxu0
      %v1632 = vpop.f32.mrb[0].mxu0
      %v1633 = vadd.f32 0.0, %v1632
      %v1634 = vpop.f32.mrb[0].mxu0
      %1635 = vdwg.mxu0
      %v1653 = vunpack.c.l.b16 %v1492
      %v1654 = vunpack.c.l.b16 %v1493
      %v1655 = vunpack.c.l.b16 %v1494
      %v1656 = vunpack.c.l.b16 %v1495
      %v1657 = vunpack.c.l.b16 %v1496
      %v1658 = vunpack.c.l.b16 %v1497
      %v1659 = vunpack.c.l.b16 %v1498
      %v1660 = vunpack.c.l.b16 %v1499
      %v1661 = vunpack.c.l.b16 %v1500
      %v1662 = vunpack.c.l.b16 %v1501
      %v1663 = vunpack.c.l.b16 %v1502
      %v1664 = vunpack.c.l.b16 %v1503
      %v1665 = vunpack.c.l.b16 %v1504
      %v1666 = vunpack.c.l.b16 %v1505
      %v1667 = vunpack.c.l.b16 %v1506
      %v1668 = vunpack.c.l.b16 %v1507
      %v1669 = vpack.c.b16 %v1654, %v1653
      %v1670 = vpack.c.b16 %v1656, %v1655
      %v1671 = vpack.c.b16 %v1658, %v1657
      %v1672 = vpack.c.b16 %v1660, %v1659
      %v1673 = vpack.c.b16 %v1662, %v1661
      %v1674 = vpack.c.b16 %v1664, %v1663
      %v1675 = vpack.c.b16 %v1666, %v1665
      %v1676 = vpack.c.b16 %v1668, %v1667
      %1685 = vmatprep.subr.bf16.mxu0 0
      %1686 = vmatpush1.bf16.msra.mxu0 %v1669
      %1687 = vmatprep.subr.bf16.mxu0 0
      %1688 = vmatpush1.bf16.msra.mxu0 %v1670
      %1689 = vmatprep.subr.bf16.mxu0 0
      %1690 = vmatpush1.bf16.msra.mxu0 %v1671
      %1691 = vmatprep.subr.bf16.mxu0 0
      %1692 = vmatpush1.bf16.msra.mxu0 %v1672
      %1693 = vmatprep.subr.bf16.mxu0 0
      %1694 = vmatpush1.bf16.msra.mxu0 %v1673
      %1695 = vmatprep.subr.bf16.mxu0 0
      %1696 = vmatpush1.bf16.msra.mxu0 %v1674
      %1697 = vmatprep.subr.bf16.mxu0 0
      %1698 = vmatpush1.bf16.msra.mxu0 %v1675
      %1699 = vmatprep.subr.bf16.mxu0 0
      %1700 = vmatpush1.bf16.msra.mxu0 %v1676
      %1701 = vmatprep.subr.bf16.mxu0 0
      %1702 = vmatpush1.bf16.msra.mxu0 0
      %1703 = vmatprep.subr.bf16.mxu0 0
      %1704 = vmatpush1.bf16.msra.mxu0 0
      %1705 = vmatprep.subr.bf16.mxu0 0
      %1706 = vmatpush1.bf16.msra.mxu0 0
      %1707 = vmatprep.subr.bf16.mxu0 0
      %1708 = vmatpush1.bf16.msra.mxu0 0
      %1709 = vmatprep.subr.bf16.mxu0 0
      %1710 = vmatpush1.bf16.msra.mxu0 0
      %1711 = vmatprep.subr.bf16.mxu0 0
      %1712 = vmatpush1.bf16.msra.mxu0 0
      %1713 = vmatprep.subr.bf16.mxu0 0
      %1714 = vmatpush1.bf16.msra.mxu0 0
      %1715 = vmatprep.subr.bf16.mxu0 0
      %1716 = vmatpush1.bf16.msra.mxu0 0
      %1717 = vmatprep.mubr.bf16.mxu0 0
      %1718 = vmatmul.mubr.bf16.gmra.mrb[0].mxu0 %v1532
      %v1719 = vpop.f32.mrb[0].mxu0
      %v1720 = vadd.f32 %v1630, %v1719
      %v1721 = vpop.f32.mrb[0].mxu0
      %v1722 = vpop.f32.mrb[0].mxu0
      %v1723 = vadd.f32 %v1633, %v1722
      %v1724 = vpop.f32.mrb[0].mxu0
      %1725 = vdwg.mxu0
      %v1726 = vld [vmem:[#allocation2] sm:$0xe]
      %s1727 = scalar_lea.vmem %s9, 128
      %v1728 = vld [vmem:[%s1727] sm:$0xf]
      %v1729 = vld [vmem:[%s1727 + $0x4] sm:$0xf]
      %v1730 = vld [vmem:[%s1727 + $0x8] sm:$0xf]
      %v1731 = vld [vmem:[%s1727 + $0xc] sm:$0xf]
      %v1732 = vld [vmem:[%s1727 + $0x10] sm:$0xf]
      %v1733 = vld [vmem:[%s1727 + $0x14] sm:$0xf]
      %v1734 = vld [vmem:[%s1727 + $0x18] sm:$0xf]
      %v1735 = vld [vmem:[%s1727 + $0x1c] sm:$0xf]
      %v1736 = vld [vmem:[%s1727 + $0x20] sm:$0xf]
      %v1737 = vld [vmem:[%s1727 + $0x24] sm:$0xf]
      %v1738 = vld [vmem:[%s1727 + $0x28] sm:$0xf]
      %v1739 = vld [vmem:[%s1727 + $0x2c] sm:$0xf]
      %v1740 = vld [vmem:[%s1727 + $0x30] sm:$0xf]
      %v1741 = vld [vmem:[%s1727 + $0x34] sm:$0xf]
      %v1742 = vld [vmem:[%s1727 + $0x38] sm:$0xf]
      %v1743 = vld [vmem:[%s1727 + $0x3c] sm:$0xf]
      %v1745 = vunpack.c.l.b16 %v1726
      %v1746 = vpack.c.b16 %v1530, %v1745
      %v1747 = vrot.slane %v1746, 1
      %v1748 = vrot.slane %v1533, 1
      %v1749 = vsel %vm906, %v1747, %v1748
      %v1767 = vunpack.c.l.b16 %v1728
      %v1768 = vunpack.c.l.b16 %v1729
      %v1769 = vunpack.c.l.b16 %v1730
      %v1770 = vunpack.c.l.b16 %v1731
      %v1771 = vunpack.c.l.b16 %v1732
      %v1772 = vunpack.c.l.b16 %v1733
      %v1773 = vunpack.c.l.b16 %v1734
      %v1774 = vunpack.c.l.b16 %v1735
      %v1775 = vunpack.c.l.b16 %v1736
      %v1776 = vunpack.c.l.b16 %v1737
      %v1777 = vunpack.c.l.b16 %v1738
      %v1778 = vunpack.c.l.b16 %v1739
      %v1779 = vunpack.c.l.b16 %v1740
      %v1780 = vunpack.c.l.b16 %v1741
      %v1781 = vunpack.c.l.b16 %v1742
      %v1782 = vunpack.c.l.b16 %v1743
      %v1783 = vpack.c.b16 %v1768, %v1767
      %v1784 = vpack.c.b16 %v1770, %v1769
      %v1785 = vpack.c.b16 %v1772, %v1771
      %v1786 = vpack.c.b16 %v1774, %v1773
      %v1787 = vpack.c.b16 %v1776, %v1775
      %v1788 = vpack.c.b16 %v1778, %v1777
      %v1789 = vpack.c.b16 %v1780, %v1779
      %v1790 = vpack.c.b16 %v1782, %v1781
      %1799 = vmatprep.subr.bf16.mxu0 0
      %1800 = vmatpush1.bf16.msra.mxu0 %v1783
      %1801 = vmatprep.subr.bf16.mxu0 0
      %1802 = vmatpush1.bf16.msra.mxu0 %v1784
      %1803 = vmatprep.subr.bf16.mxu0 0
      %1804 = vmatpush1.bf16.msra.mxu0 %v1785
      %1805 = vmatprep.subr.bf16.mxu0 0
      %1806 = vmatpush1.bf16.msra.mxu0 %v1786
      %1807 = vmatprep.subr.bf16.mxu0 0
      %1808 = vmatpush1.bf16.msra.mxu0 %v1787
      %1809 = vmatprep.subr.bf16.mxu0 0
      %1810 = vmatpush1.bf16.msra.mxu0 %v1788
      %1811 = vmatprep.subr.bf16.mxu0 0
      %1812 = vmatpush1.bf16.msra.mxu0 %v1789
      %1813 = vmatprep.subr.bf16.mxu0 0
      %1814 = vmatpush1.bf16.msra.mxu0 %v1790
      %1815 = vmatprep.subr.bf16.mxu0 0
      %1816 = vmatpush1.bf16.msra.mxu0 0
      %1817 = vmatprep.subr.bf16.mxu0 0
      %1818 = vmatpush1.bf16.msra.mxu0 0
      %1819 = vmatprep.subr.bf16.mxu0 0
      %1820 = vmatpush1.bf16.msra.mxu0 0
      %1821 = vmatprep.subr.bf16.mxu0 0
      %1822 = vmatpush1.bf16.msra.mxu0 0
      %1823 = vmatprep.subr.bf16.mxu0 0
      %1824 = vmatpush1.bf16.msra.mxu0 0
      %1825 = vmatprep.subr.bf16.mxu0 0
      %1826 = vmatpush1.bf16.msra.mxu0 0
      %1827 = vmatprep.subr.bf16.mxu0 0
      %1828 = vmatpush1.bf16.msra.mxu0 0
      %1829 = vmatprep.subr.bf16.mxu0 0
      %1830 = vmatpush1.bf16.msra.mxu0 0
      %1831 = vmatprep.mubr.bf16.mxu0 0
      %1832 = vmatmul.mubr.bf16.gmra.mrb[0].mxu0 %v1749
      %v1833 = vpop.f32.mrb[0].mxu0
      %v1834 = vadd.f32 0.0, %v1833
      %v1835 = vpop.f32.mrb[0].mxu0
      %v1836 = vpop.f32.mrb[0].mxu0
      %v1837 = vadd.f32 0.0, %v1836
      %v1838 = vpop.f32.mrb[0].mxu0
      %1839 = vdwg.mxu0
      %v1840 = vadd.f32 %v1720, %v1834
      %v1841 = vadd.f32 %v1723, %v1837
      %v1842 = vld [vmem:[#allocation2 + $0x8] sm:$0x3]
      %s1843 = scalar_lea.vmem %s9, 192
      %v1844 = vld [vmem:[%s1843] sm:$0xf]
      %v1845 = vld [vmem:[%s1843 + $0x4] sm:$0xf]
      %v1846 = vld [vmem:[%s1843 + $0x8] sm:$0xf]
      %v1847 = vld [vmem:[%s1843 + $0xc] sm:$0xf]
      %v1848 = vld [vmem:[%s1843 + $0x10] sm:$0xf]
      %v1849 = vld [vmem:[%s1843 + $0x14] sm:$0xf]
      %v1850 = vld [vmem:[%s1843 + $0x18] sm:$0xf]
      %v1851 = vld [vmem:[%s1843 + $0x1c] sm:$0xf]
      %v1852 = vld [vmem:[%s1843 + $0x20] sm:$0xf]
      %v1853 = vld [vmem:[%s1843 + $0x24] sm:$0xf]
      %v1854 = vld [vmem:[%s1843 + $0x28] sm:$0xf]
      %v1855 = vld [vmem:[%s1843 + $0x2c] sm:$0xf]
      %v1856 = vld [vmem:[%s1843 + $0x30] sm:$0xf]
      %v1857 = vld [vmem:[%s1843 + $0x34] sm:$0xf]
      %v1858 = vld [vmem:[%s1843 + $0x38] sm:$0xf]
      %v1859 = vld [vmem:[%s1843 + $0x3c] sm:$0xf]
      %v1861 = vunpack.c.l.b16 %v1842
      %v1862 = vpack.c.b16 %v1861, %v1861
      %v1864 = vshrl.u32 %v1746, 16
      %v1866 = vrot.slane %v1864, 1
      %v1867 = vshll.u32 %v1746, 16
      %v1869 = vrot.slane %v1867, 2
      %v1870 = vor.u32 %v1866, %v1869
      %v1872 = vshrl.u32 %v1862, 16
      %v1874 = vrot.slane %v1872, 1
      %v1875 = vshll.u32 %v1862, 16
      %v1877 = vrot.slane %v1875, 2
      %v1878 = vor.u32 %v1874, %v1877
      %v1879 = vsel %vm1023, %v1870, %v1878
      %v1897 = vunpack.c.l.b16 %v1844
      %v1898 = vunpack.c.l.b16 %v1845
      %v1899 = vunpack.c.l.b16 %v1846
      %v1900 = vunpack.c.l.b16 %v1847
      %v1901 = vunpack.c.l.b16 %v1848
      %v1902 = vunpack.c.l.b16 %v1849
      %v1903 = vunpack.c.l.b16 %v1850
      %v1904 = vunpack.c.l.b16 %v1851
      %v1905 = vunpack.c.l.b16 %v1852
      %v1906 = vunpack.c.l.b16 %v1853
      %v1907 = vunpack.c.l.b16 %v1854
      %v1908 = vunpack.c.l.b16 %v1855
      %v1909 = vunpack.c.l.b16 %v1856
      %v1910 = vunpack.c.l.b16 %v1857
      %v1911 = vunpack.c.l.b16 %v1858
      %v1912 = vunpack.c.l.b16 %v1859
      %v1913 = vpack.c.b16 %v1898, %v1897
      %v1914 = vpack.c.b16 %v1900, %v1899
      %v1915 = vpack.c.b16 %v1902, %v1901
      %v1916 = vpack.c.b16 %v1904, %v1903
      %v1917 = vpack.c.b16 %v1906, %v1905
      %v1918 = vpack.c.b16 %v1908, %v1907
      %v1919 = vpack.c.b16 %v1910, %v1909
      %v1920 = vpack.c.b16 %v1912, %v1911
      %1929 = vmatprep.subr.bf16.mxu0 0
      %1930 = vmatpush1.bf16.msra.mxu0 %v1913
      %1931 = vmatprep.subr.bf16.mxu0 0
      %1932 = vmatpush1.bf16.msra.mxu0 %v1914
      %1933 = vmatprep.subr.bf16.mxu0 0
      %1934 = vmatpush1.bf16.msra.mxu0 %v1915
      %1935 = vmatprep.subr.bf16.mxu0 0
      %1936 = vmatpush1.bf16.msra.mxu0 %v1916
      %1937 = vmatprep.subr.bf16.mxu0 0
      %1938 = vmatpush1.bf16.msra.mxu0 %v1917
      %1939 = vmatprep.subr.bf16.mxu0 0
      %1940 = vmatpush1.bf16.msra.mxu0 %v1918
      %1941 = vmatprep.subr.bf16.mxu0 0
      %1942 = vmatpush1.bf16.msra.mxu0 %v1919
      %1943 = vmatprep.subr.bf16.mxu0 0
      %1944 = vmatpush1.bf16.msra.mxu0 %v1920
      %1945 = vmatprep.subr.bf16.mxu0 0
      %1946 = vmatpush1.bf16.msra.mxu0 0
      %1947 = vmatprep.subr.bf16.mxu0 0
      %1948 = vmatpush1.bf16.msra.mxu0 0
      %1949 = vmatprep.subr.bf16.mxu0 0
      %1950 = vmatpush1.bf16.msra.mxu0 0
      %1951 = vmatprep.subr.bf16.mxu0 0
      %1952 = vmatpush1.bf16.msra.mxu0 0
      %1953 = vmatprep.subr.bf16.mxu0 0
      %1954 = vmatpush1.bf16.msra.mxu0 0
      %1955 = vmatprep.subr.bf16.mxu0 0
      %1956 = vmatpush1.bf16.msra.mxu0 0
      %1957 = vmatprep.subr.bf16.mxu0 0
      %1958 = vmatpush1.bf16.msra.mxu0 0
      %1959 = vmatprep.subr.bf16.mxu0 0
      %1960 = vmatpush1.bf16.msra.mxu0 0
      %1961 = vmatprep.mubr.bf16.mxu0 0
      %1962 = vmatmul.mubr.bf16.gmra.mrb[0].mxu0 %v1879
      %v1963 = vpop.f32.mrb[0].mxu0
      %v1964 = vadd.f32 0.0, %v1963
      %v1965 = vpop.f32.mrb[0].mxu0
      %v1966 = vpop.f32.mrb[0].mxu0
      %v1967 = vadd.f32 0.0, %v1966
      %v1968 = vpop.f32.mrb[0].mxu0
      %1969 = vdwg.mxu0
      %v1970 = vadd.f32 %v1840, %v1964
      %v1971 = vadd.f32 %v1841, %v1967
      %v1972 = vld [vmem:[#allocation2] sm:$0xc]
      %s1973 = scalar_lea.vmem %s9, 256
      %v1974 = vld [vmem:[%s1973] sm:$0xf]
      %v1975 = vld [vmem:[%s1973 + $0x4] sm:$0xf]
      %v1976 = vld [vmem:[%s1973 + $0x8] sm:$0xf]
      %v1977 = vld [vmem:[%s1973 + $0xc] sm:$0xf]
      %v1978 = vld [vmem:[%s1973 + $0x10] sm:$0xf]
      %v1979 = vld [vmem:[%s1973 + $0x14] sm:$0xf]
      %v1980 = vld [vmem:[%s1973 + $0x18] sm:$0xf]
      %v1981 = vld [vmem:[%s1973 + $0x1c] sm:$0xf]
      %v1982 = vld [vmem:[%s1973 + $0x20] sm:$0xf]
      %v1983 = vld [vmem:[%s1973 + $0x24] sm:$0xf]
      %v1984 = vld [vmem:[%s1973 + $0x28] sm:$0xf]
      %v1985 = vld [vmem:[%s1973 + $0x2c] sm:$0xf]
      %v1986 = vld [vmem:[%s1973 + $0x30] sm:$0xf]
      %v1987 = vld [vmem:[%s1973 + $0x34] sm:$0xf]
      %v1988 = vld [vmem:[%s1973 + $0x38] sm:$0xf]
      %v1989 = vld [vmem:[%s1973 + $0x3c] sm:$0xf]
      %v1991 = vunpack.c.l.b16 %v1972
      %v1992 = vpack.c.b16 %v1530, %v1991
      %v1993 = vrot.slane %v1992, 2
      %v1994 = vrot.slane %v1862, 2
      %v1995 = vsel %vm1154, %v1993, %v1994
      %v2013 = vunpack.c.l.b16 %v1974
      %v2014 = vunpack.c.l.b16 %v1975
      %v2015 = vunpack.c.l.b16 %v1976
      %v2016 = vunpack.c.l.b16 %v1977
      %v2017 = vunpack.c.l.b16 %v1978
      %v2018 = vunpack.c.l.b16 %v1979
      %v2019 = vunpack.c.l.b16 %v1980
      %v2020 = vunpack.c.l.b16 %v1981
      %v2021 = vunpack.c.l.b16 %v1982
      %v2022 = vunpack.c.l.b16 %v1983
      %v2023 = vunpack.c.l.b16 %v1984
      %v2024 = vunpack.c.l.b16 %v1985
      %v2025 = vunpack.c.l.b16 %v1986
      %v2026 = vunpack.c.l.b16 %v1987
      %v2027 = vunpack.c.l.b16 %v1988
      %v2028 = vunpack.c.l.b16 %v1989
      %v2029 = vpack.c.b16 %v2014, %v2013
      %v2030 = vpack.c.b16 %v2016, %v2015
      %v2031 = vpack.c.b16 %v2018, %v2017
      %v2032 = vpack.c.b16 %v2020, %v2019
      %v2033 = vpack.c.b16 %v2022, %v2021
      %v2034 = vpack.c.b16 %v2024, %v2023
      %v2035 = vpack.c.b16 %v2026, %v2025
      %v2036 = vpack.c.b16 %v2028, %v2027
      %2045 = vmatprep.subr.bf16.mxu0 0
      %2046 = vmatpush1.bf16.msra.mxu0 %v2029
      %2047 = vmatprep.subr.bf16.mxu0 0
      %2048 = vmatpush1.bf16.msra.mxu0 %v2030
      %2049 = vmatprep.subr.bf16.mxu0 0
      %2050 = vmatpush1.bf16.msra.mxu0 %v2031
      %2051 = vmatprep.subr.bf16.mxu0 0
      %2052 = vmatpush1.bf16.msra.mxu0 %v2032
      %2053 = vmatprep.subr.bf16.mxu0 0
      %2054 = vmatpush1.bf16.msra.mxu0 %v2033
      %2055 = vmatprep.subr.bf16.mxu0 0
      %2056 = vmatpush1.bf16.msra.mxu0 %v2034
      %2057 = vmatprep.subr.bf16.mxu0 0
      %2058 = vmatpush1.bf16.msra.mxu0 %v2035
      %2059 = vmatprep.subr.bf16.mxu0 0
      %2060 = vmatpush1.bf16.msra.mxu0 %v2036
      %2061 = vmatprep.subr.bf16.mxu0 0
      %2062 = vmatpush1.bf16.msra.mxu0 0
      %2063 = vmatprep.subr.bf16.mxu0 0
      %2064 = vmatpush1.bf16.msra.mxu0 0
      %2065 = vmatprep.subr.bf16.mxu0 0
      %2066 = vmatpush1.bf16.msra.mxu0 0
      %2067 = vmatprep.subr.bf16.mxu0 0
      %2068 = vmatpush1.bf16.msra.mxu0 0
      %2069 = vmatprep.subr.bf16.mxu0 0
      %2070 = vmatpush1.bf16.msra.mxu0 0
      %2071 = vmatprep.subr.bf16.mxu0 0
      %2072 = vmatpush1.bf16.msra.mxu0 0
      %2073 = vmatprep.subr.bf16.mxu0 0
      %2074 = vmatpush1.bf16.msra.mxu0 0
      %2075 = vmatprep.subr.bf16.mxu0 0
      %2076 = vmatpush1.bf16.msra.mxu0 0
      %2077 = vmatprep.mubr.bf16.mxu0 0
      %2078 = vmatmul.mubr.bf16.gmra.mrb[0].mxu0 %v1995
      %v2079 = vpop.f32.mrb[0].mxu0
      %v2080 = vadd.f32 0.0, %v2079
      %v2081 = vpop.f32.mrb[0].mxu0
      %v2082 = vpop.f32.mrb[0].mxu0
      %v2083 = vadd.f32 0.0, %v2082
      %v2084 = vpop.f32.mrb[0].mxu0
      %2085 = vdwg.mxu0
      %v2086 = vadd.f32 %v1970, %v2080
      %v2087 = vadd.f32 %v1971, %v2083
      %v2089 = vlaneseq
      %v2090 = vshrl.u32 %v2089, 7
      %v2091 = vsub.s32 0, %v2090
      %v2092 = vrot.slane %v1489, %v2091
      %v2094 = vadd.f32 %v2086, %v2092
      %v2095 = vadd.f32 %v2087, %v2092
      %v2096 = vadd.f32 %v420, %v2094
      %v2097 = vadd.f32 %v421, %v2095
      %2098 = vst [vmem:[%s400] sm:$0xff] %v2096
      %2099 = vst [vmem:[%s400 + $0x8] sm:$0xff] %v2097
      %p2100 = scmp.lt.s32.totalorder %s22, 1
      %s2101 = scalar_select %p2100, %s22, 1
      %s2102 = smul.addr %s2101, 2
      %s2103 = smul.addr %s2102, 8
      %s2104 = scalar_lea.vmem %s11, %s2103
      // Predicated region
      $region65: #{_lambda_.1} parent=63 // pred_check
        %p2105 = pneg %p281
      $region66: #{_lambda_.1} parent=63 // pred_check_branch
        %2107 = sbr.rel (%p2105) target = $region68
      $region67: #{_lambda_.1} parent=63 // pred_region
        _
      $region68: #{_lambda_.1} parent=63 // pred_fallthru
        _
    $region64: #{_lambda_.1} parent=5 // pred_fallthru
      _
    %p2108 = scmp.le.s32.totalorder 2, %s17
    // Predicated region
    $region69: #{_lambda_.1} parent=5 // pred_check
      %p2109 = pneg %p2108
    $region70: #{_lambda_.1} parent=5 // pred_check_branch
      %2111 = sbr.rel (%p2109) target = $region72
    $region71: #{_lambda_.1} parent=5 // pred_region
      %s2112 = ssub.s32 %s17, 2
      // Predicated region
      $region73: #{_lambda_.1} parent=71 // pred_check
        %p2113 = pneg %p287
      $region74: #{_lambda_.1} parent=71 // pred_check_branch
        %2115 = sbr.rel (%p2113) target = $region76
      $region75: #{_lambda_.1} parent=71 // pred_region
        %p2116 = scmp.lt.s32.totalorder %s23, 1
        %s2117 = scalar_select %p2116, %s23, 1
        %s2118 = smul.addr %s2117, 2
        %s2119 = smul.addr %s2118, 8
        %s2120 = scalar_lea.vmem %s11, %s2119
      $region76: #{_lambda_.1} parent=71 // pred_fallthru
        _
    $region72: #{_lambda_.1} parent=5 // pred_fallthru
      _
  $region6: #{_lambda_.1} parent=0 // loop_footer
    %s21 = sadd.s32 1, %s17
  $region7: #{_lambda_.1} parent=0 // loop_footer_branch
    %16 = sbr.rel target = $region3
  $region8: #{_lambda_.1} parent=0 // loop_exit
    _

</llo_original>
